<compile_context>
chip_gen: v7x
topology: tpu7x:2x2x1
jax: 0.10.0
libtpu: 0.0.40
codegen_flags: <defaults>
</compile_context>

<pallas_src>
import jax
import jax.numpy as jnp
from jax.experimental import pallas as pl
from jax.experimental.pallas import tpu as pltpu

# ---------------- problem sizes (small, consistent with the module) ----------
N, C, H, W = 2, 4, 16, 16          # input x: [2, 4, 16, 16]  (NCHW)
MAX_DET    = 128                   # max detections per image (lane aligned)
PER_DET    = 6                     # 4 box coords + 1 score logit + 1 class logit
K          = C * H * W             # 1024
BOX_COLS   = 4 * MAX_DET           # 512
HEAD_OUT   = PER_DET * MAX_DET     # 768

# output slab layout: [boxes 0:512 | scores 512:640 | numdet 640:768 | classes 768:896]
SCORE_OFF  = BOX_COLS              # 512
NUMDET_OFF = SCORE_OFF + MAX_DET   # 640
CLS_OFF    = NUMDET_OFF + MAX_DET  # 768
SLAB_COLS  = CLS_OFF + MAX_DET     # 896


# ---------------- shared epilogue math (used by kernel AND reference) --------
def _sigmoid_f32(x):
    # Exact divide kept (approx reciprocal would need re-validating 1e-4 tolerance).
    return 1.0 / (1.0 + jnp.exp(-x))


def _class_ids(cls_logits):
    # floor(|logit| * 3) % 10, written with explicit floor/div so the kernel
    # and the plain-JAX reference use bit-identical formulas.
    v = jnp.floor(jnp.abs(cls_logits) * 3.0)
    return v - jnp.floor(v / 10.0) * 10.0


# ---------------- fused kernel -----------------------------------------------
def _fused_kernel(x_ref, w_ref, out_ref):
    # In-kernel bf16 cast of x (essentially free on the VPU), then MXU matmul
    # with f32 accumulation: [N, K] @ [K, HEAD_OUT] -> [N, 768].
    x_bf16 = x_ref[...].astype(jnp.bfloat16)
    feats = jnp.dot(x_bf16, w_ref[...], preferred_element_type=jnp.float32)

    # Field-blocked, lane-dense slices (multiples of 128 lanes -> no relayout).
    boxes        = feats[:, :BOX_COLS]                            # [N, 512]
    score_logits = feats[:, BOX_COLS:BOX_COLS + MAX_DET]          # [N, 128]
    cls_logits   = feats[:, BOX_COLS + MAX_DET:]                  # [N, 128]

    # num_det[n] = #(sigmoid(logit) > 0.5) == #(logit > 0): cheap int VPU path,
    # decoupled from the sigmoid chain.
    nd = jnp.sum((score_logits > 0.0).astype(jnp.int32), axis=1, keepdims=True)  # [N,1]

    # fill_helper: det_classes[n, num_det[n]:] = -1.0, then f32 cast.
    idx = jax.lax.broadcasted_iota(jnp.int32, (out_ref.shape[0], MAX_DET), 1)
    classes = jnp.where(idx >= nd, jnp.float32(-1.0), _class_ids(cls_logits))

    # Single lane-dense output slab: one writeback DMA instead of four tiny stores.
    out_ref[:, 0:BOX_COLS]              = boxes
    out_ref[:, SCORE_OFF:NUMDET_OFF]    = _sigmoid_f32(score_logits)        # EUP exp
    out_ref[:, NUMDET_OFF:CLS_OFF]      = jnp.broadcast_to(
        nd.astype(jnp.float32), (out_ref.shape[0], MAX_DET))
    out_ref[:, CLS_OFF:SLAB_COLS]       = classes


def _fused_call(x_f32_2d, w_bf16):
    cost = pl.CostEstimate(
        flops=2 * N * K * HEAD_OUT,
        transcendentals=N * MAX_DET,
        bytes_accessed=N * K * 4 + K * HEAD_OUT * 2 + N * SLAB_COLS * 4,
    )
    vmem = pl.BlockSpec(memory_space=pltpu.MemorySpace.VMEM)
    return pl.pallas_call(
        _fused_kernel,
        out_shape=jax.ShapeDtypeStruct((N, SLAB_COLS), jnp.float32),
        in_specs=[vmem, vmem],
        out_specs=vmem,
        cost_estimate=cost,
    )(x_f32_2d, w_bf16)


# ---------------- weight init: one-time column permutation to field-blocked --
def field_blocked_weight(w_raw):
    """Permute an interleaved head weight (col = det*6 + field) into
    [boxes(det*4+coord) | score_logits(det) | class_logits(det)] and cast bf16."""
    det = jnp.arange(MAX_DET)
    box_cols   = (det[:, None] * PER_DET + jnp.arange(4)[None, :]).reshape(-1)  # 512
    score_cols = det * PER_DET + 4                                               # 128
    class_cols = det * PER_DET + 5                                               # 128
    perm = jnp.concatenate([box_cols, score_cols, class_cols])                   # 768
    return w_raw[:, perm].astype(jnp.bfloat16)


# ---------------- End2EndRVFillOutput_TRT.forward ----------------------------
@jax.jit
def end2end_rv_fill_output(x, w_fb_bf16):
    # NCHW flatten (row-major, matching torch .view); bf16 cast happens IN-kernel.
    x2d = x.reshape(N, K)
    slab = _fused_call(x2d, w_fb_bf16)
    boxes       = slab[:, 0:BOX_COLS].reshape(N, MAX_DET, 4)   # col = det*4 + coord
    scores      = slab[:, SCORE_OFF:NUMDET_OFF]
    num_det_f32 = slab[:, NUMDET_OFF]                          # torch.tensor(x[0], f32)
    cls_filled  = slab[:, CLS_OFF:SLAB_COLS]
    return num_det_f32, boxes, scores, cls_filled


# ---------------- reference (plain JAX, interleaved weight) ------------------
def _reference(x, w_raw):
    x2d = x.reshape(N, K).astype(jnp.bfloat16)
    wb = w_raw.astype(jnp.bfloat16)
    feats = jnp.dot(x2d, wb, preferred_element_type=jnp.float32)
    feats = feats.reshape(N, MAX_DET, PER_DET)
    boxes = feats[:, :, 0:4]
    score_logits = feats[:, :, 4]
    scores = _sigmoid_f32(score_logits)
    classes = _class_ids(feats[:, :, 5])
    num_det = jnp.sum(score_logits > 0.0, axis=1)
    idx = jnp.arange(MAX_DET)[None, :]
    filled = jnp.where(idx >= num_det[:, None], jnp.float32(-1.0), classes)
    return num_det.astype(jnp.float32), boxes, scores, filled.astype(jnp.float32)


if __name__ == "__main__":
    key = jax.random.PRNGKey(0)
    kx, kw = jax.random.split(key)
    x = jax.random.normal(kx, (N, C, H, W), dtype=jnp.float32)          # NCHW input
    w_raw = 0.05 * jax.random.normal(kw, (K, HEAD_OUT), dtype=jnp.float32)
    w_fb = field_blocked_weight(w_raw)     # one-time permutation + bf16 cast

    out = end2end_rv_fill_output(x, w_fb)
    jax.block_until_ready(out)

    ref = _reference(x, w_raw)
    assert jnp.allclose(out[0], ref[0]), "num_det mismatch"
    assert jnp.allclose(out[1], ref[1], atol=1e-4, rtol=1e-4), "boxes mismatch"
    assert jnp.allclose(out[2], ref[2], atol=1e-4, rtol=1e-4), "scores mismatch"
    assert jnp.allclose(out[3], ref[3], atol=1e-4, rtol=1e-4), "filled classes mismatch"

    print("KERNEL_OK")
</pallas_src>

<mosaic_0001>
module attributes {stable_mosaic.version = 11 : i64} {
  func.func @_fused_kernel(%arg0: memref<2x1024xf32, #tpu.memory_space<vmem>>, %arg1: memref<1024x768xbf16, #tpu.memory_space<vmem>>, %arg2: memref<2x896xf32, #tpu.memory_space<vmem>>) attributes {dimension_semantics = [], scalar_prefetch = 0 : i64, scratch_operands = 0 : i64, tpu.core_type = #tpu.core_type<tc>} {
    %c0 = arith.constant 0 : index
    %c0_0 = arith.constant 0 : index
    %0 = vector.load %arg0[%c0, %c0_0] : memref<2x1024xf32, #tpu.memory_space<vmem>>, vector<2x1024xf32>
    %1 = arith.truncf %0 : vector<2x1024xf32> to vector<2x1024xbf16>
    %c0_1 = arith.constant 0 : index
    %c0_2 = arith.constant 0 : index
    %2 = vector.load %arg1[%c0_1, %c0_2] : memref<1024x768xbf16, #tpu.memory_space<vmem>>, vector<1024x768xbf16>
    %cst = arith.constant dense<0.000000e+00> : vector<2x768xf32>
    %3 = tpu.matmul %1, %2, %cst {dimension_numbers = #tpu.dot_dimension_numbers<[1], [0], [0], [1], [0, 0, 1, 1], [], []>} : vector<2x1024xbf16>, vector<1024x768xbf16>, vector<2x768xf32> -> vector<2x768xf32>
    %4 = vector.extract_strided_slice %3 {offsets = [0, 0], sizes = [2, 512], strides = [1, 1]} : vector<2x768xf32> to vector<2x512xf32>
    %5 = vector.extract_strided_slice %3 {offsets = [0, 512], sizes = [2, 128], strides = [1, 1]} : vector<2x768xf32> to vector<2x128xf32>
    %6 = vector.extract_strided_slice %3 {offsets = [0, 640], sizes = [2, 128], strides = [1, 1]} : vector<2x768xf32> to vector<2x128xf32>
    %cst_3 = arith.constant 0.000000e+00 : f32
    %7 = vector.broadcast %cst_3 : f32 to vector<2x128xf32>
    %8 = arith.cmpf ogt, %5, %7 : vector<2x128xf32>
    %9 = arith.extui %8 : vector<2x128xi1> to vector<2x128xi32>
    %cst_4 = arith.constant dense<0> : vector<2xi32>
    %10 = vector.multi_reduction <add>, %9, %cst_4 [1] : vector<2x128xi32> to vector<2xi32>
    %11 = vector.shape_cast %10 : vector<2xi32> to vector<2x1xi32>
    %12 = tpu.iota {dimensions = array<i32: 1>} : vector<2x128xi32>
    %13 = vector.broadcast %11 : vector<2x1xi32> to vector<2x128xi32>
    %14 = arith.cmpi sge, %12, %13 : vector<2x128xi32>
    %15 = math.absf %6 : vector<2x128xf32>
    %cst_5 = arith.constant 3.000000e+00 : f32
    %16 = vector.broadcast %cst_5 : f32 to vector<2x128xf32>
    %17 = arith.mulf %15, %16 : vector<2x128xf32>
    %18 = math.floor %17 : vector<2x128xf32>
    %cst_6 = arith.constant 1.000000e+01 : f32
    %19 = vector.broadcast %cst_6 : f32 to vector<2x128xf32>
    %20 = arith.divf %18, %19 : vector<2x128xf32>
    %21 = math.floor %20 : vector<2x128xf32>
    %cst_7 = arith.constant 1.000000e+01 : f32
    %22 = vector.broadcast %cst_7 : f32 to vector<2x128xf32>
    %23 = arith.mulf %21, %22 : vector<2x128xf32>
    %24 = arith.subf %18, %23 : vector<2x128xf32>
    %cst_8 = arith.constant -1.000000e+00 : f32
    %25 = vector.broadcast %cst_8 : f32 to vector<2x128xf32>
    %26 = arith.select %14, %25, %24 : vector<2x128xi1>, vector<2x128xf32>
    %c0_9 = arith.constant 0 : index
    %c0_10 = arith.constant 0 : index
    %27 = vector.load %arg2[%c0_9, %c0_10] : memref<2x896xf32, #tpu.memory_space<vmem>>, vector<2x512xf32>
    tpu.vector_store %arg2[%c0_9, %c0_10], %4 {strides = array<i32>} : memref<2x896xf32, #tpu.memory_space<vmem>>, vector<2x512xf32>,
    %cst_11 = arith.constant 0.000000e+00 : f32
    %28 = vector.broadcast %cst_11 : f32 to vector<2x128xf32>
    %29 = arith.subf %28, %5 : vector<2x128xf32>
    %30 = math.exp %29 : vector<2x128xf32>
    %cst_12 = arith.constant 1.000000e+00 : f32
    %31 = vector.broadcast %cst_12 : f32 to vector<2x128xf32>
    %32 = arith.addf %31, %30 : vector<2x128xf32>
    %cst_13 = arith.constant 1.000000e+00 : f32
    %33 = vector.broadcast %cst_13 : f32 to vector<2x128xf32>
    %34 = arith.divf %33, %32 : vector<2x128xf32>
    %c0_14 = arith.constant 0 : index
    %c512 = arith.constant 512 : index
    %35 = vector.load %arg2[%c0_14, %c512] : memref<2x896xf32, #tpu.memory_space<vmem>>, vector<2x128xf32>
    tpu.vector_store %arg2[%c0_14, %c512], %34 {strides = array<i32>} : memref<2x896xf32, #tpu.memory_space<vmem>>, vector<2x128xf32>,
    %36 = arith.sitofp %11 : vector<2x1xi32> to vector<2x1xf32>
    %37 = vector.shape_cast %36 : vector<2x1xf32> to vector<2x1xf32>
    %38 = vector.broadcast %37 : vector<2x1xf32> to vector<2x128xf32>
    %c0_15 = arith.constant 0 : index
    %c640 = arith.constant 640 : index
    %39 = vector.load %arg2[%c0_15, %c640] : memref<2x896xf32, #tpu.memory_space<vmem>>, vector<2x128xf32>
    tpu.vector_store %arg2[%c0_15, %c640], %38 {strides = array<i32>} : memref<2x896xf32, #tpu.memory_space<vmem>>, vector<2x128xf32>,
    %c0_16 = arith.constant 0 : index
    %c768 = arith.constant 768 : index
    %40 = vector.load %arg2[%c0_16, %c768] : memref<2x896xf32, #tpu.memory_space<vmem>>, vector<2x128xf32>
    tpu.vector_store %arg2[%c0_16, %c768], %26 {strides = array<i32>} : memref<2x896xf32, #tpu.memory_space<vmem>>, vector<2x128xf32>,
    return
  }
}

</mosaic_0001>

<llo_original>
// kernel: end2end_rv_fill_output.1
$region0: #{end2end_rv_fill_output.1}
  #allocation0 [shape = 'u32[]', space=smem, size = 0x4, offset = 0x4, fixed_abs, tag = 'smem constant byte address 0x4 - core index']
  #allocation1 [shape = 'u32[144,128]{1,0:T(1,128)}', space=vmem, size = 0x12000, scoped, tag = 'internal scratch']
  %s0 = inlined_call_operand.vmem [shape: f32[2,1024], index: 0, kind: input, shape index: {}]
  %s1 = inlined_call_operand.hbm [shape: bf16[1024,768], index: 1, kind: input, shape index: {}]
  %s2 = inlined_call_operand.vmem [shape: f32[2,896], index: 2, kind: output, shape index: {}]
  %s3 = sld [smem:[#allocation0]]
  $region22: #{end2end_rv_fill_output.1} parent=0
    _
  %s5 = ssub.s32 1, %s3
  %s6 = scalar_select 0, %s5, %s3
  $region1: #{end2end_rv_fill_output.1} parent=0
    #allocation2 [shape = 'u8[1572864]{0}', space=vmem, size = 0x180000, scoped, tag = 'input window, operand 1, single buffered']
    #allocation3 [shape = 's32[1]{0}', space=sflag, size = 0x4, scoped, tag = 'scoped memory for end2end_rv_fill_output.1']
    %7 = vsyncpa [#allocation3], 0
    // Predicated region
    $region2: #{end2end_rv_fill_output.1} parent=1 // pred_check
      _
    $region3: #{end2end_rv_fill_output.1} parent=1 // pred_check_branch
      %9 = sbr.rel (0) target = $region5
    $region4: #{end2end_rv_fill_output.1} parent=1 // pred_region
      _
    $region5: #{end2end_rv_fill_output.1} parent=1 // pred_fallthru
      _
    // Predicated region
    $region6: #{end2end_rv_fill_output.1} parent=1 // pred_check
      _
    $region7: #{end2end_rv_fill_output.1} parent=1 // pred_check_branch
      %11 = sbr.rel (0) target = $region9
    $region8: #{end2end_rv_fill_output.1} parent=1 // pred_region
      %s13 = ssub.s32 49152, 49152
      %14 = vsyncadd [#allocation3], %s13
      %s15 = sshll.u32 [#allocation2], 4
      %s16 = int_to_ptr.vmem [resolvable:$true] %s15
      %21 = dma.hbm_to_vmem [thread:$0]  %s1, 49152, %s16, [#allocation3], 384, 384, 24
    $region9: #{end2end_rv_fill_output.1} parent=1 // pred_fallthru
      _
    // Predicated region
    $region10: #{end2end_rv_fill_output.1} parent=1 // pred_check
      _
    $region11: #{end2end_rv_fill_output.1} parent=1 // pred_check_branch
      %23 = sbr.rel (0) target = $region13
    $region12: #{end2end_rv_fill_output.1} parent=1 // pred_region
      %24 = dma.done [#allocation3], 49152
    $region13: #{end2end_rv_fill_output.1} parent=1 // pred_fallthru
      _
    %v25 = vld [vmem:[%s0] sm:$0xff]
    %v26 = vld [vmem:[%s0 + $0x8] sm:$0xff]
    %v29 = vcombine.high %v25, %v25
    %v31 = vunpack.c.l.s4 1983009808
    %v32 = vunpack.c.0.s8 %v31
    %v33 = vlaneseq
    %v34 = vshrl.u32 %v33, 7
    %v35 = vsub.s32 %v32, %v34
    %v36 = vrot.slane %v25, %v35
    %v38 = vunpack.c.l.s4 1983009808
    %v39 = vunpack.c.0.s8 %v38
    %v40 = vlaneseq
    %v41 = vshrl.u32 %v40, 7
    %v42 = vsub.s32 %v39, %v41
    %v43 = vrot.slane %v29, %v42
    %v44 = vcombine.high %v36, %v36
    %v45 = vcombine.high %v43, %v43
    %v46 = vcombine.high %v26, %v26
    %v48 = vunpack.c.l.s4 1983009808
    %v49 = vunpack.c.0.s8 %v48
    %v50 = vlaneseq
    %v51 = vshrl.u32 %v50, 7
    %v52 = vsub.s32 %v49, %v51
    %v53 = vrot.slane %v26, %v52
    %v55 = vunpack.c.l.s4 1983009808
    %v56 = vunpack.c.0.s8 %v55
    %v57 = vlaneseq
    %v58 = vshrl.u32 %v57, 7
    %v59 = vsub.s32 %v56, %v58
    %v60 = vrot.slane %v46, %v59
    %v61 = vcombine.high %v53, %v53
    %v62 = vcombine.high %v60, %v60
    %v71 = vpack.c.bf16 %v36, %v36
    %v72 = vpack.c.bf16 %v44, %v44
    %v73 = vpack.c.bf16 %v43, %v43
    %v74 = vpack.c.bf16 %v45, %v45
    %v75 = vpack.c.bf16 %v53, %v53
    %v76 = vpack.c.bf16 %v61, %v61
    %v77 = vpack.c.bf16 %v60, %v60
    %v78 = vpack.c.bf16 %v62, %v62
    %v79 = vld [vmem:[#allocation2] sm:$0xff]
    %v80 = vld [vmem:[#allocation2 + $0x8] sm:$0xff]
    %v81 = vld [vmem:[#allocation2 + $0x10] sm:$0xff]
    %v82 = vld [vmem:[#allocation2 + $0x18] sm:$0xff]
    %v83 = vld [vmem:[#allocation2 + $0x20] sm:$0xff]
    %v84 = vld [vmem:[#allocation2 + $0x28] sm:$0xff]
    %v85 = vld [vmem:[#allocation2 + $0x30] sm:$0xff]
    %v86 = vld [vmem:[#allocation2 + $0x38] sm:$0xff]
    %v87 = vld [vmem:[#allocation2 + $0x40] sm:$0xff]
    %v88 = vld [vmem:[#allocation2 + $0x48] sm:$0xff]
    %v89 = vld [vmem:[#allocation2 + $0x50] sm:$0xff]
    %v90 = vld [vmem:[#allocation2 + $0x58] sm:$0xff]
    %v91 = vld [vmem:[#allocation2 + $0x60] sm:$0xff]
    %v92 = vld [vmem:[#allocation2 + $0x68] sm:$0xff]
    %v93 = vld [vmem:[#allocation2 + $0x70] sm:$0xff]
    %v94 = vld [vmem:[#allocation2 + $0x78] sm:$0xff]
    %v95 = vld [vmem:[#allocation2 + $0x80] sm:$0xff]
    %v96 = vld [vmem:[#allocation2 + $0x88] sm:$0xff]
    %v97 = vld [vmem:[#allocation2 + $0x90] sm:$0xff]
    %v98 = vld [vmem:[#allocation2 + $0x98] sm:$0xff]
    %v99 = vld [vmem:[#allocation2 + $0xa0] sm:$0xff]
    %v100 = vld [vmem:[#allocation2 + $0xa8] sm:$0xff]
    %v101 = vld [vmem:[#allocation2 + $0xb0] sm:$0xff]
    %v102 = vld [vmem:[#allocation2 + $0xb8] sm:$0xff]
    %v103 = vld [vmem:[#allocation2 + $0xc0] sm:$0xff]
    %v104 = vld [vmem:[#allocation2 + $0xc8] sm:$0xff]
    %v105 = vld [vmem:[#allocation2 + $0xd0] sm:$0xff]
    %v106 = vld [vmem:[#allocation2 + $0xd8] sm:$0xff]
    %v107 = vld [vmem:[#allocation2 + $0xe0] sm:$0xff]
    %v108 = vld [vmem:[#allocation2 + $0xe8] sm:$0xff]
    %v109 = vld [vmem:[#allocation2 + $0xf0] sm:$0xff]
    %v110 = vld [vmem:[#allocation2 + $0xf8] sm:$0xff]
    %v111 = vld [vmem:[#allocation2 + $0x100] sm:$0xff]
    %v112 = vld [vmem:[#allocation2 + $0x108] sm:$0xff]
    %v113 = vld [vmem:[#allocation2 + $0x110] sm:$0xff]
    %v114 = vld [vmem:[#allocation2 + $0x118] sm:$0xff]
    %v115 = vld [vmem:[#allocation2 + $0x120] sm:$0xff]
    %v116 = vld [vmem:[#allocation2 + $0x128] sm:$0xff]
    %v117 = vld [vmem:[#allocation2 + $0x130] sm:$0xff]
    %v118 = vld [vmem:[#allocation2 + $0x138] sm:$0xff]
    %v119 = vld [vmem:[#allocation2 + $0x140] sm:$0xff]
    %v120 = vld [vmem:[#allocation2 + $0x148] sm:$0xff]
    %v121 = vld [vmem:[#allocation2 + $0x150] sm:$0xff]
    %v122 = vld [vmem:[#allocation2 + $0x158] sm:$0xff]
    %v123 = vld [vmem:[#allocation2 + $0x160] sm:$0xff]
    %v124 = vld [vmem:[#allocation2 + $0x168] sm:$0xff]
    %v125 = vld [vmem:[#allocation2 + $0x170] sm:$0xff]
    %v126 = vld [vmem:[#allocation2 + $0x178] sm:$0xff]
    %v127 = vld [vmem:[#allocation2 + $0x180] sm:$0xff]
    %v128 = vld [vmem:[#allocation2 + $0x188] sm:$0xff]
    %v129 = vld [vmem:[#allocation2 + $0x190] sm:$0xff]
    %v130 = vld [vmem:[#allocation2 + $0x198] sm:$0xff]
    %v131 = vld [vmem:[#allocation2 + $0x1a0] sm:$0xff]
    %v132 = vld [vmem:[#allocation2 + $0x1a8] sm:$0xff]
    %v133 = vld [vmem:[#allocation2 + $0x1b0] sm:$0xff]
    %v134 = vld [vmem:[#allocation2 + $0x1b8] sm:$0xff]
    %v135 = vld [vmem:[#allocation2 + $0x1c0] sm:$0xff]
    %v136 = vld [vmem:[#allocation2 + $0x1c8] sm:$0xff]
    %v137 = vld [vmem:[#allocation2 + $0x1d0] sm:$0xff]
    %v138 = vld [vmem:[#allocation2 + $0x1d8] sm:$0xff]
    %v139 = vld [vmem:[#allocation2 + $0x1e0] sm:$0xff]
    %v140 = vld [vmem:[#allocation2 + $0x1e8] sm:$0xff]
    %v141 = vld [vmem:[#allocation2 + $0x1f0] sm:$0xff]
    %v142 = vld [vmem:[#allocation2 + $0x1f8] sm:$0xff]
    %v143 = vld [vmem:[#allocation2 + $0x200] sm:$0xff]
    %v144 = vld [vmem:[#allocation2 + $0x208] sm:$0xff]
    %v145 = vld [vmem:[#allocation2 + $0x210] sm:$0xff]
    %v146 = vld [vmem:[#allocation2 + $0x218] sm:$0xff]
    %v147 = vld [vmem:[#allocation2 + $0x220] sm:$0xff]
    %v148 = vld [vmem:[#allocation2 + $0x228] sm:$0xff]
    %v149 = vld [vmem:[#allocation2 + $0x230] sm:$0xff]
    %v150 = vld [vmem:[#allocation2 + $0x238] sm:$0xff]
    %v151 = vld [vmem:[#allocation2 + $0x240] sm:$0xff]
    %v152 = vld [vmem:[#allocation2 + $0x248] sm:$0xff]
    %v153 = vld [vmem:[#allocation2 + $0x250] sm:$0xff]
    %v154 = vld [vmem:[#allocation2 + $0x258] sm:$0xff]
    %v155 = vld [vmem:[#allocation2 + $0x260] sm:$0xff]
    %v156 = vld [vmem:[#allocation2 + $0x268] sm:$0xff]
    %v157 = vld [vmem:[#allocation2 + $0x270] sm:$0xff]
    %v158 = vld [vmem:[#allocation2 + $0x278] sm:$0xff]
    %v159 = vld [vmem:[#allocation2 + $0x280] sm:$0xff]
    %v160 = vld [vmem:[#allocation2 + $0x288] sm:$0xff]
    %v161 = vld [vmem:[#allocation2 + $0x290] sm:$0xff]
    %v162 = vld [vmem:[#allocation2 + $0x298] sm:$0xff]
    %v163 = vld [vmem:[#allocation2 + $0x2a0] sm:$0xff]
    %v164 = vld [vmem:[#allocation2 + $0x2a8] sm:$0xff]
    %v165 = vld [vmem:[#allocation2 + $0x2b0] sm:$0xff]
    %v166 = vld [vmem:[#allocation2 + $0x2b8] sm:$0xff]
    %v167 = vld [vmem:[#allocation2 + $0x2c0] sm:$0xff]
    %v168 = vld [vmem:[#allocation2 + $0x2c8] sm:$0xff]
    %v169 = vld [vmem:[#allocation2 + $0x2d0] sm:$0xff]
    %v170 = vld [vmem:[#allocation2 + $0x2d8] sm:$0xff]
    %v171 = vld [vmem:[#allocation2 + $0x2e0] sm:$0xff]
    %v172 = vld [vmem:[#allocation2 + $0x2e8] sm:$0xff]
    %v173 = vld [vmem:[#allocation2 + $0x2f0] sm:$0xff]
    %v174 = vld [vmem:[#allocation2 + $0x2f8] sm:$0xff]
    %v175 = vld [vmem:[#allocation2 + $0x300] sm:$0xff]
    %v176 = vld [vmem:[#allocation2 + $0x308] sm:$0xff]
    %v177 = vld [vmem:[#allocation2 + $0x310] sm:$0xff]
    %v178 = vld [vmem:[#allocation2 + $0x318] sm:$0xff]
    %v179 = vld [vmem:[#allocation2 + $0x320] sm:$0xff]
    %v180 = vld [vmem:[#allocation2 + $0x328] sm:$0xff]
    %v181 = vld [vmem:[#allocation2 + $0x330] sm:$0xff]
    %v182 = vld [vmem:[#allocation2 + $0x338] sm:$0xff]
    %v183 = vld [vmem:[#allocation2 + $0x340] sm:$0xff]
    %v184 = vld [vmem:[#allocation2 + $0x348] sm:$0xff]
    %v185 = vld [vmem:[#allocation2 + $0x350] sm:$0xff]
    %v186 = vld [vmem:[#allocation2 + $0x358] sm:$0xff]
    %v187 = vld [vmem:[#allocation2 + $0x360] sm:$0xff]
    %v188 = vld [vmem:[#allocation2 + $0x368] sm:$0xff]
    %v189 = vld [vmem:[#allocation2 + $0x370] sm:$0xff]
    %v190 = vld [vmem:[#allocation2 + $0x378] sm:$0xff]
    %v191 = vld [vmem:[#allocation2 + $0x380] sm:$0xff]
    %v192 = vld [vmem:[#allocation2 + $0x388] sm:$0xff]
    %v193 = vld [vmem:[#allocation2 + $0x390] sm:$0xff]
    %v194 = vld [vmem:[#allocation2 + $0x398] sm:$0xff]
    %v195 = vld [vmem:[#allocation2 + $0x3a0] sm:$0xff]
    %v196 = vld [vmem:[#allocation2 + $0x3a8] sm:$0xff]
    %v197 = vld [vmem:[#allocation2 + $0x3b0] sm:$0xff]
    %v198 = vld [vmem:[#allocation2 + $0x3b8] sm:$0xff]
    %v199 = vld [vmem:[#allocation2 + $0x3c0] sm:$0xff]
    %v200 = vld [vmem:[#allocation2 + $0x3c8] sm:$0xff]
    %v201 = vld [vmem:[#allocation2 + $0x3d0] sm:$0xff]
    %v202 = vld [vmem:[#allocation2 + $0x3d8] sm:$0xff]
    %v203 = vld [vmem:[#allocation2 + $0x3e0] sm:$0xff]
    %v204 = vld [vmem:[#allocation2 + $0x3e8] sm:$0xff]
    %v205 = vld [vmem:[#allocation2 + $0x3f0] sm:$0xff]
    %v206 = vld [vmem:[#allocation2 + $0x3f8] sm:$0xff]
    %v207 = vld [vmem:[#allocation2 + $0x400] sm:$0xff]
    %v208 = vld [vmem:[#allocation2 + $0x408] sm:$0xff]
    %v209 = vld [vmem:[#allocation2 + $0x410] sm:$0xff]
    %v210 = vld [vmem:[#allocation2 + $0x418] sm:$0xff]
    %v211 = vld [vmem:[#allocation2 + $0x420] sm:$0xff]
    %v212 = vld [vmem:[#allocation2 + $0x428] sm:$0xff]
    %v213 = vld [vmem:[#allocation2 + $0x430] sm:$0xff]
    %v214 = vld [vmem:[#allocation2 + $0x438] sm:$0xff]
    %v215 = vld [vmem:[#allocation2 + $0x440] sm:$0xff]
    %v216 = vld [vmem:[#allocation2 + $0x448] sm:$0xff]
    %v217 = vld [vmem:[#allocation2 + $0x450] sm:$0xff]
    %v218 = vld [vmem:[#allocation2 + $0x458] sm:$0xff]
    %v219 = vld [vmem:[#allocation2 + $0x460] sm:$0xff]
    %v220 = vld [vmem:[#allocation2 + $0x468] sm:$0xff]
    %v221 = vld [vmem:[#allocation2 + $0x470] sm:$0xff]
    %v222 = vld [vmem:[#allocation2 + $0x478] sm:$0xff]
    %v223 = vld [vmem:[#allocation2 + $0x480] sm:$0xff]
    %v224 = vld [vmem:[#allocation2 + $0x488] sm:$0xff]
    %v225 = vld [vmem:[#allocation2 + $0x490] sm:$0xff]
    %v226 = vld [vmem:[#allocation2 + $0x498] sm:$0xff]
    %v227 = vld [vmem:[#allocation2 + $0x4a0] sm:$0xff]
    %v228 = vld [vmem:[#allocation2 + $0x4a8] sm:$0xff]
    %v229 = vld [vmem:[#allocation2 + $0x4b0] sm:$0xff]
    %v230 = vld [vmem:[#allocation2 + $0x4b8] sm:$0xff]
    %v231 = vld [vmem:[#allocation2 + $0x4c0] sm:$0xff]
    %v232 = vld [vmem:[#allocation2 + $0x4c8] sm:$0xff]
    %v233 = vld [vmem:[#allocation2 + $0x4d0] sm:$0xff]
    %v234 = vld [vmem:[#allocation2 + $0x4d8] sm:$0xff]
    %v235 = vld [vmem:[#allocation2 + $0x4e0] sm:$0xff]
    %v236 = vld [vmem:[#allocation2 + $0x4e8] sm:$0xff]
    %v237 = vld [vmem:[#allocation2 + $0x4f0] sm:$0xff]
    %v238 = vld [vmem:[#allocation2 + $0x4f8] sm:$0xff]
    %v239 = vld [vmem:[#allocation2 + $0x500] sm:$0xff]
    %v240 = vld [vmem:[#allocation2 + $0x508] sm:$0xff]
    %v241 = vld [vmem:[#allocation2 + $0x510] sm:$0xff]
    %v242 = vld [vmem:[#allocation2 + $0x518] sm:$0xff]
    %v243 = vld [vmem:[#allocation2 + $0x520] sm:$0xff]
    %v244 = vld [vmem:[#allocation2 + $0x528] sm:$0xff]
    %v245 = vld [vmem:[#allocation2 + $0x530] sm:$0xff]
    %v246 = vld [vmem:[#allocation2 + $0x538] sm:$0xff]
    %v247 = vld [vmem:[#allocation2 + $0x540] sm:$0xff]
    %v248 = vld [vmem:[#allocation2 + $0x548] sm:$0xff]
    %v249 = vld [vmem:[#allocation2 + $0x550] sm:$0xff]
    %v250 = vld [vmem:[#allocation2 + $0x558] sm:$0xff]
    %v251 = vld [vmem:[#allocation2 + $0x560] sm:$0xff]
    %v252 = vld [vmem:[#allocation2 + $0x568] sm:$0xff]
    %v253 = vld [vmem:[#allocation2 + $0x570] sm:$0xff]
    %v254 = vld [vmem:[#allocation2 + $0x578] sm:$0xff]
    %v255 = vld [vmem:[#allocation2 + $0x580] sm:$0xff]
    %v256 = vld [vmem:[#allocation2 + $0x588] sm:$0xff]
    %v257 = vld [vmem:[#allocation2 + $0x590] sm:$0xff]
    %v258 = vld [vmem:[#allocation2 + $0x598] sm:$0xff]
    %v259 = vld [vmem:[#allocation2 + $0x5a0] sm:$0xff]
    %v260 = vld [vmem:[#allocation2 + $0x5a8] sm:$0xff]
    %v261 = vld [vmem:[#allocation2 + $0x5b0] sm:$0xff]
    %v262 = vld [vmem:[#allocation2 + $0x5b8] sm:$0xff]
    %v263 = vld [vmem:[#allocation2 + $0x5c0] sm:$0xff]
    %v264 = vld [vmem:[#allocation2 + $0x5c8] sm:$0xff]
    %v265 = vld [vmem:[#allocation2 + $0x5d0] sm:$0xff]
    %v266 = vld [vmem:[#allocation2 + $0x5d8] sm:$0xff]
    %v267 = vld [vmem:[#allocation2 + $0x5e0] sm:$0xff]
    %v268 = vld [vmem:[#allocation2 + $0x5e8] sm:$0xff]
    %v269 = vld [vmem:[#allocation2 + $0x5f0] sm:$0xff]
    %v270 = vld [vmem:[#allocation2 + $0x5f8] sm:$0xff]
    %v271 = vld [vmem:[#allocation2 + $0x600] sm:$0xff]
    %v272 = vld [vmem:[#allocation2 + $0x608] sm:$0xff]
    %v273 = vld [vmem:[#allocation2 + $0x610] sm:$0xff]
    %v274 = vld [vmem:[#allocation2 + $0x618] sm:$0xff]
    %v275 = vld [vmem:[#allocation2 + $0x620] sm:$0xff]
    %v276 = vld [vmem:[#allocation2 + $0x628] sm:$0xff]
    %v277 = vld [vmem:[#allocation2 + $0x630] sm:$0xff]
    %v278 = vld [vmem:[#allocation2 + $0x638] sm:$0xff]
    %v279 = vld [vmem:[#allocation2 + $0x640] sm:$0xff]
    %v280 = vld [vmem:[#allocation2 + $0x648] sm:$0xff]
    %v281 = vld [vmem:[#allocation2 + $0x650] sm:$0xff]
    %v282 = vld [vmem:[#allocation2 + $0x658] sm:$0xff]
    %v283 = vld [vmem:[#allocation2 + $0x660] sm:$0xff]
    %v284 = vld [vmem:[#allocation2 + $0x668] sm:$0xff]
    %v285 = vld [vmem:[#allocation2 + $0x670] sm:$0xff]
    %v286 = vld [vmem:[#allocation2 + $0x678] sm:$0xff]
    %v287 = vld [vmem:[#allocation2 + $0x680] sm:$0xff]
    %v288 = vld [vmem:[#allocation2 + $0x688] sm:$0xff]
    %v289 = vld [vmem:[#allocation2 + $0x690] sm:$0xff]
    %v290 = vld [vmem:[#allocation2 + $0x698] sm:$0xff]
    %v291 = vld [vmem:[#allocation2 + $0x6a0] sm:$0xff]
    %v292 = vld [vmem:[#allocation2 + $0x6a8] sm:$0xff]
    %v293 = vld [vmem:[#allocation2 + $0x6b0] sm:$0xff]
    %v294 = vld [vmem:[#allocation2 + $0x6b8] sm:$0xff]
    %v295 = vld [vmem:[#allocation2 + $0x6c0] sm:$0xff]
    %v296 = vld [vmem:[#allocation2 + $0x6c8] sm:$0xff]
    %v297 = vld [vmem:[#allocation2 + $0x6d0] sm:$0xff]
    %v298 = vld [vmem:[#allocation2 + $0x6d8] sm:$0xff]
    %v299 = vld [vmem:[#allocation2 + $0x6e0] sm:$0xff]
    %v300 = vld [vmem:[#allocation2 + $0x6e8] sm:$0xff]
    %v301 = vld [vmem:[#allocation2 + $0x6f0] sm:$0xff]
    %v302 = vld [vmem:[#allocation2 + $0x6f8] sm:$0xff]
    %v303 = vld [vmem:[#allocation2 + $0x700] sm:$0xff]
    %v304 = vld [vmem:[#allocation2 + $0x708] sm:$0xff]
    %v305 = vld [vmem:[#allocation2 + $0x710] sm:$0xff]
    %v306 = vld [vmem:[#allocation2 + $0x718] sm:$0xff]
    %v307 = vld [vmem:[#allocation2 + $0x720] sm:$0xff]
    %v308 = vld [vmem:[#allocation2 + $0x728] sm:$0xff]
    %v309 = vld [vmem:[#allocation2 + $0x730] sm:$0xff]
    %v310 = vld [vmem:[#allocation2 + $0x738] sm:$0xff]
    %v311 = vld [vmem:[#allocation2 + $0x740] sm:$0xff]
    %v312 = vld [vmem:[#allocation2 + $0x748] sm:$0xff]
    %v313 = vld [vmem:[#allocation2 + $0x750] sm:$0xff]
    %v314 = vld [vmem:[#allocation2 + $0x758] sm:$0xff]
    %v315 = vld [vmem:[#allocation2 + $0x760] sm:$0xff]
    %v316 = vld [vmem:[#allocation2 + $0x768] sm:$0xff]
    %v317 = vld [vmem:[#allocation2 + $0x770] sm:$0xff]
    %v318 = vld [vmem:[#allocation2 + $0x778] sm:$0xff]
    %v319 = vld [vmem:[#allocation2 + $0x780] sm:$0xff]
    %v320 = vld [vmem:[#allocation2 + $0x788] sm:$0xff]
    %v321 = vld [vmem:[#allocation2 + $0x790] sm:$0xff]
    %v322 = vld [vmem:[#allocation2 + $0x798] sm:$0xff]
    %v323 = vld [vmem:[#allocation2 + $0x7a0] sm:$0xff]
    %v324 = vld [vmem:[#allocation2 + $0x7a8] sm:$0xff]
    %v325 = vld [vmem:[#allocation2 + $0x7b0] sm:$0xff]
    %v326 = vld [vmem:[#allocation2 + $0x7b8] sm:$0xff]
    %v327 = vld [vmem:[#allocation2 + $0x7c0] sm:$0xff]
    %v328 = vld [vmem:[#allocation2 + $0x7c8] sm:$0xff]
    %v329 = vld [vmem:[#allocation2 + $0x7d0] sm:$0xff]
    %v330 = vld [vmem:[#allocation2 + $0x7d8] sm:$0xff]
    %v331 = vld [vmem:[#allocation2 + $0x7e0] sm:$0xff]
    %v332 = vld [vmem:[#allocation2 + $0x7e8] sm:$0xff]
    %v333 = vld [vmem:[#allocation2 + $0x7f0] sm:$0xff]
    %v334 = vld [vmem:[#allocation2 + $0x7f8] sm:$0xff]
    %v335 = vld [vmem:[#allocation2 + $0x800] sm:$0xff]
    %v336 = vld [vmem:[#allocation2 + $0x808] sm:$0xff]
    %v337 = vld [vmem:[#allocation2 + $0x810] sm:$0xff]
    %v338 = vld [vmem:[#allocation2 + $0x818] sm:$0xff]
    %v339 = vld [vmem:[#allocation2 + $0x820] sm:$0xff]
    %v340 = vld [vmem:[#allocation2 + $0x828] sm:$0xff]
    %v341 = vld [vmem:[#allocation2 + $0x830] sm:$0xff]
    %v342 = vld [vmem:[#allocation2 + $0x838] sm:$0xff]
    %v343 = vld [vmem:[#allocation2 + $0x840] sm:$0xff]
    %v344 = vld [vmem:[#allocation2 + $0x848] sm:$0xff]
    %v345 = vld [vmem:[#allocation2 + $0x850] sm:$0xff]
    %v346 = vld [vmem:[#allocation2 + $0x858] sm:$0xff]
    %v347 = vld [vmem:[#allocation2 + $0x860] sm:$0xff]
    %v348 = vld [vmem:[#allocation2 + $0x868] sm:$0xff]
    %v349 = vld [vmem:[#allocation2 + $0x870] sm:$0xff]
    %v350 = vld [vmem:[#allocation2 + $0x878] sm:$0xff]
    %v351 = vld [vmem:[#allocation2 + $0x880] sm:$0xff]
    %v352 = vld [vmem:[#allocation2 + $0x888] sm:$0xff]
    %v353 = vld [vmem:[#allocation2 + $0x890] sm:$0xff]
    %v354 = vld [vmem:[#allocation2 + $0x898] sm:$0xff]
    %v355 = vld [vmem:[#allocation2 + $0x8a0] sm:$0xff]
    %v356 = vld [vmem:[#allocation2 + $0x8a8] sm:$0xff]
    %v357 = vld [vmem:[#allocation2 + $0x8b0] sm:$0xff]
    %v358 = vld [vmem:[#allocation2 + $0x8b8] sm:$0xff]
    %v359 = vld [vmem:[#allocation2 + $0x8c0] sm:$0xff]
    %v360 = vld [vmem:[#allocation2 + $0x8c8] sm:$0xff]
    %v361 = vld [vmem:[#allocation2 + $0x8d0] sm:$0xff]
    %v362 = vld [vmem:[#allocation2 + $0x8d8] sm:$0xff]
    %v363 = vld [vmem:[#allocation2 + $0x8e0] sm:$0xff]
    %v364 = vld [vmem:[#allocation2 + $0x8e8] sm:$0xff]
    %v365 = vld [vmem:[#allocation2 + $0x8f0] sm:$0xff]
    %v366 = vld [vmem:[#allocation2 + $0x8f8] sm:$0xff]
    %v367 = vld [vmem:[#allocation2 + $0x900] sm:$0xff]
    %v368 = vld [vmem:[#allocation2 + $0x908] sm:$0xff]
    %v369 = vld [vmem:[#allocation2 + $0x910] sm:$0xff]
    %v370 = vld [vmem:[#allocation2 + $0x918] sm:$0xff]
    %v371 = vld [vmem:[#allocation2 + $0x920] sm:$0xff]
    %v372 = vld [vmem:[#allocation2 + $0x928] sm:$0xff]
    %v373 = vld [vmem:[#allocation2 + $0x930] sm:$0xff]
    %v374 = vld [vmem:[#allocation2 + $0x938] sm:$0xff]
    %v375 = vld [vmem:[#allocation2 + $0x940] sm:$0xff]
    %v376 = vld [vmem:[#allocation2 + $0x948] sm:$0xff]
    %v377 = vld [vmem:[#allocation2 + $0x950] sm:$0xff]
    %v378 = vld [vmem:[#allocation2 + $0x958] sm:$0xff]
    %v379 = vld [vmem:[#allocation2 + $0x960] sm:$0xff]
    %v380 = vld [vmem:[#allocation2 + $0x968] sm:$0xff]
    %v381 = vld [vmem:[#allocation2 + $0x970] sm:$0xff]
    %v382 = vld [vmem:[#allocation2 + $0x978] sm:$0xff]
    %v383 = vld [vmem:[#allocation2 + $0x980] sm:$0xff]
    %v384 = vld [vmem:[#allocation2 + $0x988] sm:$0xff]
    %v385 = vld [vmem:[#allocation2 + $0x990] sm:$0xff]
    %v386 = vld [vmem:[#allocation2 + $0x998] sm:$0xff]
    %v387 = vld [vmem:[#allocation2 + $0x9a0] sm:$0xff]
    %v388 = vld [vmem:[#allocation2 + $0x9a8] sm:$0xff]
    %v389 = vld [vmem:[#allocation2 + $0x9b0] sm:$0xff]
    %v390 = vld [vmem:[#allocation2 + $0x9b8] sm:$0xff]
    %v391 = vld [vmem:[#allocation2 + $0x9c0] sm:$0xff]
    %v392 = vld [vmem:[#allocation2 + $0x9c8] sm:$0xff]
    %v393 = vld [vmem:[#allocation2 + $0x9d0] sm:$0xff]
    %v394 = vld [vmem:[#allocation2 + $0x9d8] sm:$0xff]
    %v395 = vld [vmem:[#allocation2 + $0x9e0] sm:$0xff]
    %v396 = vld [vmem:[#allocation2 + $0x9e8] sm:$0xff]
    %v397 = vld [vmem:[#allocation2 + $0x9f0] sm:$0xff]
    %v398 = vld [vmem:[#allocation2 + $0x9f8] sm:$0xff]
    %v399 = vld [vmem:[#allocation2 + $0xa00] sm:$0xff]
    %v400 = vld [vmem:[#allocation2 + $0xa08] sm:$0xff]
    %v401 = vld [vmem:[#allocation2 + $0xa10] sm:$0xff]
    %v402 = vld [vmem:[#allocation2 + $0xa18] sm:$0xff]
    %v403 = vld [vmem:[#allocation2 + $0xa20] sm:$0xff]
    %v404 = vld [vmem:[#allocation2 + $0xa28] sm:$0xff]
    %v405 = vld [vmem:[#allocation2 + $0xa30] sm:$0xff]
    %v406 = vld [vmem:[#allocation2 + $0xa38] sm:$0xff]
    %v407 = vld [vmem:[#allocation2 + $0xa40] sm:$0xff]
    %v408 = vld [vmem:[#allocation2 + $0xa48] sm:$0xff]
    %v409 = vld [vmem:[#allocation2 + $0xa50] sm:$0xff]
    %v410 = vld [vmem:[#allocation2 + $0xa58] sm:$0xff]
    %v411 = vld [vmem:[#allocation2 + $0xa60] sm:$0xff]
    %v412 = vld [vmem:[#allocation2 + $0xa68] sm:$0xff]
    %v413 = vld [vmem:[#allocation2 + $0xa70] sm:$0xff]
    %v414 = vld [vmem:[#allocation2 + $0xa78] sm:$0xff]
    %v415 = vld [vmem:[#allocation2 + $0xa80] sm:$0xff]
    %v416 = vld [vmem:[#allocation2 + $0xa88] sm:$0xff]
    %v417 = vld [vmem:[#allocation2 + $0xa90] sm:$0xff]
    %v418 = vld [vmem:[#allocation2 + $0xa98] sm:$0xff]
    %v419 = vld [vmem:[#allocation2 + $0xaa0] sm:$0xff]
    %v420 = vld [vmem:[#allocation2 + $0xaa8] sm:$0xff]
    %v421 = vld [vmem:[#allocation2 + $0xab0] sm:$0xff]
    %v422 = vld [vmem:[#allocation2 + $0xab8] sm:$0xff]
    %v423 = vld [vmem:[#allocation2 + $0xac0] sm:$0xff]
    %v424 = vld [vmem:[#allocation2 + $0xac8] sm:$0xff]
    %v425 = vld [vmem:[#allocation2 + $0xad0] sm:$0xff]
    %v426 = vld [vmem:[#allocation2 + $0xad8] sm:$0xff]
    %v427 = vld [vmem:[#allocation2 + $0xae0] sm:$0xff]
    %v428 = vld [vmem:[#allocation2 + $0xae8] sm:$0xff]
    %v429 = vld [vmem:[#allocation2 + $0xaf0] sm:$0xff]
    %v430 = vld [vmem:[#allocation2 + $0xaf8] sm:$0xff]
    %v431 = vld [vmem:[#allocation2 + $0xb00] sm:$0xff]
    %v432 = vld [vmem:[#allocation2 + $0xb08] sm:$0xff]
    %v433 = vld [vmem:[#allocation2 + $0xb10] sm:$0xff]
    %v434 = vld [vmem:[#allocation2 + $0xb18] sm:$0xff]
    %v435 = vld [vmem:[#allocation2 + $0xb20] sm:$0xff]
    %v436 = vld [vmem:[#allocation2 + $0xb28] sm:$0xff]
    %v437 = vld [vmem:[#allocation2 + $0xb30] sm:$0xff]
    %v438 = vld [vmem:[#allocation2 + $0xb38] sm:$0xff]
    %v439 = vld [vmem:[#allocation2 + $0xb40] sm:$0xff]
    %v440 = vld [vmem:[#allocation2 + $0xb48] sm:$0xff]
    %v441 = vld [vmem:[#allocation2 + $0xb50] sm:$0xff]
    %v442 = vld [vmem:[#allocation2 + $0xb58] sm:$0xff]
    %v443 = vld [vmem:[#allocation2 + $0xb60] sm:$0xff]
    %v444 = vld [vmem:[#allocation2 + $0xb68] sm:$0xff]
    %v445 = vld [vmem:[#allocation2 + $0xb70] sm:$0xff]
    %v446 = vld [vmem:[#allocation2 + $0xb78] sm:$0xff]
    %v447 = vld [vmem:[#allocation2 + $0xb80] sm:$0xff]
    %v448 = vld [vmem:[#allocation2 + $0xb88] sm:$0xff]
    %v449 = vld [vmem:[#allocation2 + $0xb90] sm:$0xff]
    %v450 = vld [vmem:[#allocation2 + $0xb98] sm:$0xff]
    %v451 = vld [vmem:[#allocation2 + $0xba0] sm:$0xff]
    %v452 = vld [vmem:[#allocation2 + $0xba8] sm:$0xff]
    %v453 = vld [vmem:[#allocation2 + $0xbb0] sm:$0xff]
    %v454 = vld [vmem:[#allocation2 + $0xbb8] sm:$0xff]
    %v455 = vld [vmem:[#allocation2 + $0xbc0] sm:$0xff]
    %v456 = vld [vmem:[#allocation2 + $0xbc8] sm:$0xff]
    %v457 = vld [vmem:[#allocation2 + $0xbd0] sm:$0xff]
    %v458 = vld [vmem:[#allocation2 + $0xbd8] sm:$0xff]
    %v459 = vld [vmem:[#allocation2 + $0xbe0] sm:$0xff]
    %v460 = vld [vmem:[#allocation2 + $0xbe8] sm:$0xff]
    %v461 = vld [vmem:[#allocation2 + $0xbf0] sm:$0xff]
    %v462 = vld [vmem:[#allocation2 + $0xbf8] sm:$0xff]
    %v847 = vunpack.c.l.b16 %v79
    %v848 = vunpack.c.h.b16 %v79
    %v849 = vunpack.c.l.b16 %v80
    %v850 = vunpack.c.h.b16 %v80
    %v851 = vunpack.c.l.b16 %v81
    %v852 = vunpack.c.h.b16 %v81
    %v853 = vunpack.c.l.b16 %v82
    %v854 = vunpack.c.h.b16 %v82
    %v855 = vunpack.c.l.b16 %v83
    %v856 = vunpack.c.h.b16 %v83
    %v857 = vunpack.c.l.b16 %v84
    %v858 = vunpack.c.h.b16 %v84
    %v859 = vunpack.c.l.b16 %v85
    %v860 = vunpack.c.h.b16 %v85
    %v861 = vunpack.c.l.b16 %v86
    %v862 = vunpack.c.h.b16 %v86
    %v863 = vunpack.c.l.b16 %v87
    %v864 = vunpack.c.h.b16 %v87
    %v865 = vunpack.c.l.b16 %v88
    %v866 = vunpack.c.h.b16 %v88
    %v867 = vunpack.c.l.b16 %v89
    %v868 = vunpack.c.h.b16 %v89
    %v869 = vunpack.c.l.b16 %v90
    %v870 = vunpack.c.h.b16 %v90
    %v871 = vunpack.c.l.b16 %v91
    %v872 = vunpack.c.h.b16 %v91
    %v873 = vunpack.c.l.b16 %v92
    %v874 = vunpack.c.h.b16 %v92
    %v875 = vunpack.c.l.b16 %v93
    %v876 = vunpack.c.h.b16 %v93
    %v877 = vunpack.c.l.b16 %v94
    %v878 = vunpack.c.h.b16 %v94
    %v879 = vunpack.c.l.b16 %v95
    %v880 = vunpack.c.h.b16 %v95
    %v881 = vunpack.c.l.b16 %v96
    %v882 = vunpack.c.h.b16 %v96
    %v883 = vunpack.c.l.b16 %v97
    %v884 = vunpack.c.h.b16 %v97
    %v885 = vunpack.c.l.b16 %v98
    %v886 = vunpack.c.h.b16 %v98
    %v887 = vunpack.c.l.b16 %v99
    %v888 = vunpack.c.h.b16 %v99
    %v889 = vunpack.c.l.b16 %v100
    %v890 = vunpack.c.h.b16 %v100
    %v891 = vunpack.c.l.b16 %v101
    %v892 = vunpack.c.h.b16 %v101
    %v893 = vunpack.c.l.b16 %v102
    %v894 = vunpack.c.h.b16 %v102
    %v895 = vunpack.c.l.b16 %v103
    %v896 = vunpack.c.h.b16 %v103
    %v897 = vunpack.c.l.b16 %v104
    %v898 = vunpack.c.h.b16 %v104
    %v899 = vunpack.c.l.b16 %v105
    %v900 = vunpack.c.h.b16 %v105
    %v901 = vunpack.c.l.b16 %v106
    %v902 = vunpack.c.h.b16 %v106
    %v903 = vunpack.c.l.b16 %v107
    %v904 = vunpack.c.h.b16 %v107
    %v905 = vunpack.c.l.b16 %v108
    %v906 = vunpack.c.h.b16 %v108
    %v907 = vunpack.c.l.b16 %v109
    %v908 = vunpack.c.h.b16 %v109
    %v909 = vunpack.c.l.b16 %v110
    %v910 = vunpack.c.h.b16 %v110
    %v911 = vunpack.c.l.b16 %v111
    %v912 = vunpack.c.h.b16 %v111
    %v913 = vunpack.c.l.b16 %v112
    %v914 = vunpack.c.h.b16 %v112
    %v915 = vunpack.c.l.b16 %v113
    %v916 = vunpack.c.h.b16 %v113
    %v917 = vunpack.c.l.b16 %v114
    %v918 = vunpack.c.h.b16 %v114
    %v919 = vunpack.c.l.b16 %v115
    %v920 = vunpack.c.h.b16 %v115
    %v921 = vunpack.c.l.b16 %v116
    %v922 = vunpack.c.h.b16 %v116
    %v923 = vunpack.c.l.b16 %v117
    %v924 = vunpack.c.h.b16 %v117
    %v925 = vunpack.c.l.b16 %v118
    %v926 = vunpack.c.h.b16 %v118
    %v927 = vunpack.c.l.b16 %v119
    %v928 = vunpack.c.h.b16 %v119
    %v929 = vunpack.c.l.b16 %v120
    %v930 = vunpack.c.h.b16 %v120
    %v931 = vunpack.c.l.b16 %v121
    %v932 = vunpack.c.h.b16 %v121
    %v933 = vunpack.c.l.b16 %v122
    %v934 = vunpack.c.h.b16 %v122
    %v935 = vunpack.c.l.b16 %v123
    %v936 = vunpack.c.h.b16 %v123
    %v937 = vunpack.c.l.b16 %v124
    %v938 = vunpack.c.h.b16 %v124
    %v939 = vunpack.c.l.b16 %v125
    %v940 = vunpack.c.h.b16 %v125
    %v941 = vunpack.c.l.b16 %v126
    %v942 = vunpack.c.h.b16 %v126
    %v943 = vunpack.c.l.b16 %v127
    %v944 = vunpack.c.h.b16 %v127
    %v945 = vunpack.c.l.b16 %v128
    %v946 = vunpack.c.h.b16 %v128
    %v947 = vunpack.c.l.b16 %v129
    %v948 = vunpack.c.h.b16 %v129
    %v949 = vunpack.c.l.b16 %v130
    %v950 = vunpack.c.h.b16 %v130
    %v951 = vunpack.c.l.b16 %v131
    %v952 = vunpack.c.h.b16 %v131
    %v953 = vunpack.c.l.b16 %v132
    %v954 = vunpack.c.h.b16 %v132
    %v955 = vunpack.c.l.b16 %v133
    %v956 = vunpack.c.h.b16 %v133
    %v957 = vunpack.c.l.b16 %v134
    %v958 = vunpack.c.h.b16 %v134
    %v959 = vunpack.c.l.b16 %v135
    %v960 = vunpack.c.h.b16 %v135
    %v961 = vunpack.c.l.b16 %v136
    %v962 = vunpack.c.h.b16 %v136
    %v963 = vunpack.c.l.b16 %v137
    %v964 = vunpack.c.h.b16 %v137
    %v965 = vunpack.c.l.b16 %v138
    %v966 = vunpack.c.h.b16 %v138
    %v967 = vunpack.c.l.b16 %v139
    %v968 = vunpack.c.h.b16 %v139
    %v969 = vunpack.c.l.b16 %v140
    %v970 = vunpack.c.h.b16 %v140
    %v971 = vunpack.c.l.b16 %v141
    %v972 = vunpack.c.h.b16 %v141
    %v973 = vunpack.c.l.b16 %v142
    %v974 = vunpack.c.h.b16 %v142
    %v975 = vunpack.c.l.b16 %v143
    %v976 = vunpack.c.h.b16 %v143
    %v977 = vunpack.c.l.b16 %v144
    %v978 = vunpack.c.h.b16 %v144
    %v979 = vunpack.c.l.b16 %v145
    %v980 = vunpack.c.h.b16 %v145
    %v981 = vunpack.c.l.b16 %v146
    %v982 = vunpack.c.h.b16 %v146
    %v983 = vunpack.c.l.b16 %v147
    %v984 = vunpack.c.h.b16 %v147
    %v985 = vunpack.c.l.b16 %v148
    %v986 = vunpack.c.h.b16 %v148
    %v987 = vunpack.c.l.b16 %v149
    %v988 = vunpack.c.h.b16 %v149
    %v989 = vunpack.c.l.b16 %v150
    %v990 = vunpack.c.h.b16 %v150
    %v991 = vunpack.c.l.b16 %v151
    %v992 = vunpack.c.h.b16 %v151
    %v993 = vunpack.c.l.b16 %v152
    %v994 = vunpack.c.h.b16 %v152
    %v995 = vunpack.c.l.b16 %v153
    %v996 = vunpack.c.h.b16 %v153
    %v997 = vunpack.c.l.b16 %v154
    %v998 = vunpack.c.h.b16 %v154
    %v999 = vunpack.c.l.b16 %v155
    %v1000 = vunpack.c.h.b16 %v155
    %v1001 = vunpack.c.l.b16 %v156
    %v1002 = vunpack.c.h.b16 %v156
    %v1003 = vunpack.c.l.b16 %v157
    %v1004 = vunpack.c.h.b16 %v157
    %v1005 = vunpack.c.l.b16 %v158
    %v1006 = vunpack.c.h.b16 %v158
    %v1007 = vunpack.c.l.b16 %v159
    %v1008 = vunpack.c.h.b16 %v159
    %v1009 = vunpack.c.l.b16 %v160
    %v1010 = vunpack.c.h.b16 %v160
    %v1011 = vunpack.c.l.b16 %v161
    %v1012 = vunpack.c.h.b16 %v161
    %v1013 = vunpack.c.l.b16 %v162
    %v1014 = vunpack.c.h.b16 %v162
    %v1015 = vunpack.c.l.b16 %v163
    %v1016 = vunpack.c.h.b16 %v163
    %v1017 = vunpack.c.l.b16 %v164
    %v1018 = vunpack.c.h.b16 %v164
    %v1019 = vunpack.c.l.b16 %v165
    %v1020 = vunpack.c.h.b16 %v165
    %v1021 = vunpack.c.l.b16 %v166
    %v1022 = vunpack.c.h.b16 %v166
    %v1023 = vunpack.c.l.b16 %v167
    %v1024 = vunpack.c.h.b16 %v167
    %v1025 = vunpack.c.l.b16 %v168
    %v1026 = vunpack.c.h.b16 %v168
    %v1027 = vunpack.c.l.b16 %v169
    %v1028 = vunpack.c.h.b16 %v169
    %v1029 = vunpack.c.l.b16 %v170
    %v1030 = vunpack.c.h.b16 %v170
    %v1031 = vunpack.c.l.b16 %v171
    %v1032 = vunpack.c.h.b16 %v171
    %v1033 = vunpack.c.l.b16 %v172
    %v1034 = vunpack.c.h.b16 %v172
    %v1035 = vunpack.c.l.b16 %v173
    %v1036 = vunpack.c.h.b16 %v173
    %v1037 = vunpack.c.l.b16 %v174
    %v1038 = vunpack.c.h.b16 %v174
    %v1039 = vunpack.c.l.b16 %v175
    %v1040 = vunpack.c.h.b16 %v175
    %v1041 = vunpack.c.l.b16 %v176
    %v1042 = vunpack.c.h.b16 %v176
    %v1043 = vunpack.c.l.b16 %v177
    %v1044 = vunpack.c.h.b16 %v177
    %v1045 = vunpack.c.l.b16 %v178
    %v1046 = vunpack.c.h.b16 %v178
    %v1047 = vunpack.c.l.b16 %v179
    %v1048 = vunpack.c.h.b16 %v179
    %v1049 = vunpack.c.l.b16 %v180
    %v1050 = vunpack.c.h.b16 %v180
    %v1051 = vunpack.c.l.b16 %v181
    %v1052 = vunpack.c.h.b16 %v181
    %v1053 = vunpack.c.l.b16 %v182
    %v1054 = vunpack.c.h.b16 %v182
    %v1055 = vunpack.c.l.b16 %v183
    %v1056 = vunpack.c.h.b16 %v183
    %v1057 = vunpack.c.l.b16 %v184
    %v1058 = vunpack.c.h.b16 %v184
    %v1059 = vunpack.c.l.b16 %v185
    %v1060 = vunpack.c.h.b16 %v185
    %v1061 = vunpack.c.l.b16 %v186
    %v1062 = vunpack.c.h.b16 %v186
    %v1063 = vunpack.c.l.b16 %v187
    %v1064 = vunpack.c.h.b16 %v187
    %v1065 = vunpack.c.l.b16 %v188
    %v1066 = vunpack.c.h.b16 %v188
    %v1067 = vunpack.c.l.b16 %v189
    %v1068 = vunpack.c.h.b16 %v189
    %v1069 = vunpack.c.l.b16 %v190
    %v1070 = vunpack.c.h.b16 %v190
    %v1071 = vunpack.c.l.b16 %v191
    %v1072 = vunpack.c.h.b16 %v191
    %v1073 = vunpack.c.l.b16 %v192
    %v1074 = vunpack.c.h.b16 %v192
    %v1075 = vunpack.c.l.b16 %v193
    %v1076 = vunpack.c.h.b16 %v193
    %v1077 = vunpack.c.l.b16 %v194
    %v1078 = vunpack.c.h.b16 %v194
    %v1079 = vunpack.c.l.b16 %v195
    %v1080 = vunpack.c.h.b16 %v195
    %v1081 = vunpack.c.l.b16 %v196
    %v1082 = vunpack.c.h.b16 %v196
    %v1083 = vunpack.c.l.b16 %v197
    %v1084 = vunpack.c.h.b16 %v197
    %v1085 = vunpack.c.l.b16 %v198
    %v1086 = vunpack.c.h.b16 %v198
    %v1087 = vunpack.c.l.b16 %v199
    %v1088 = vunpack.c.h.b16 %v199
    %v1089 = vunpack.c.l.b16 %v200
    %v1090 = vunpack.c.h.b16 %v200
    %v1091 = vunpack.c.l.b16 %v201
    %v1092 = vunpack.c.h.b16 %v201
    %v1093 = vunpack.c.l.b16 %v202
    %v1094 = vunpack.c.h.b16 %v202
    %v1095 = vunpack.c.l.b16 %v203
    %v1096 = vunpack.c.h.b16 %v203
    %v1097 = vunpack.c.l.b16 %v204
    %v1098 = vunpack.c.h.b16 %v204
    %v1099 = vunpack.c.l.b16 %v205
    %v1100 = vunpack.c.h.b16 %v205
    %v1101 = vunpack.c.l.b16 %v206
    %v1102 = vunpack.c.h.b16 %v206
    %v1103 = vunpack.c.l.b16 %v207
    %v1104 = vunpack.c.h.b16 %v207
    %v1105 = vunpack.c.l.b16 %v208
    %v1106 = vunpack.c.h.b16 %v208
    %v1107 = vunpack.c.l.b16 %v209
    %v1108 = vunpack.c.h.b16 %v209
    %v1109 = vunpack.c.l.b16 %v210
    %v1110 = vunpack.c.h.b16 %v210
    %v1111 = vunpack.c.l.b16 %v211
    %v1112 = vunpack.c.h.b16 %v211
    %v1113 = vunpack.c.l.b16 %v212
    %v1114 = vunpack.c.h.b16 %v212
    %v1115 = vunpack.c.l.b16 %v213
    %v1116 = vunpack.c.h.b16 %v213
    %v1117 = vunpack.c.l.b16 %v214
    %v1118 = vunpack.c.h.b16 %v214
    %v1119 = vunpack.c.l.b16 %v215
    %v1120 = vunpack.c.h.b16 %v215
    %v1121 = vunpack.c.l.b16 %v216
    %v1122 = vunpack.c.h.b16 %v216
    %v1123 = vunpack.c.l.b16 %v217
    %v1124 = vunpack.c.h.b16 %v217
    %v1125 = vunpack.c.l.b16 %v218
    %v1126 = vunpack.c.h.b16 %v218
    %v1127 = vunpack.c.l.b16 %v219
    %v1128 = vunpack.c.h.b16 %v219
    %v1129 = vunpack.c.l.b16 %v220
    %v1130 = vunpack.c.h.b16 %v220
    %v1131 = vunpack.c.l.b16 %v221
    %v1132 = vunpack.c.h.b16 %v221
    %v1133 = vunpack.c.l.b16 %v222
    %v1134 = vunpack.c.h.b16 %v222
    %v1135 = vunpack.c.l.b16 %v223
    %v1136 = vunpack.c.h.b16 %v223
    %v1137 = vunpack.c.l.b16 %v224
    %v1138 = vunpack.c.h.b16 %v224
    %v1139 = vunpack.c.l.b16 %v225
    %v1140 = vunpack.c.h.b16 %v225
    %v1141 = vunpack.c.l.b16 %v226
    %v1142 = vunpack.c.h.b16 %v226
    %v1143 = vunpack.c.l.b16 %v227
    %v1144 = vunpack.c.h.b16 %v227
    %v1145 = vunpack.c.l.b16 %v228
    %v1146 = vunpack.c.h.b16 %v228
    %v1147 = vunpack.c.l.b16 %v229
    %v1148 = vunpack.c.h.b16 %v229
    %v1149 = vunpack.c.l.b16 %v230
    %v1150 = vunpack.c.h.b16 %v230
    %v1151 = vunpack.c.l.b16 %v231
    %v1152 = vunpack.c.h.b16 %v231
    %v1153 = vunpack.c.l.b16 %v232
    %v1154 = vunpack.c.h.b16 %v232
    %v1155 = vunpack.c.l.b16 %v233
    %v1156 = vunpack.c.h.b16 %v233
    %v1157 = vunpack.c.l.b16 %v234
    %v1158 = vunpack.c.h.b16 %v234
    %v1159 = vunpack.c.l.b16 %v235
    %v1160 = vunpack.c.h.b16 %v235
    %v1161 = vunpack.c.l.b16 %v236
    %v1162 = vunpack.c.h.b16 %v236
    %v1163 = vunpack.c.l.b16 %v237
    %v1164 = vunpack.c.h.b16 %v237
    %v1165 = vunpack.c.l.b16 %v238
    %v1166 = vunpack.c.h.b16 %v238
    %v1167 = vunpack.c.l.b16 %v239
    %v1168 = vunpack.c.h.b16 %v239
    %v1169 = vunpack.c.l.b16 %v240
    %v1170 = vunpack.c.h.b16 %v240
    %v1171 = vunpack.c.l.b16 %v241
    %v1172 = vunpack.c.h.b16 %v241
    %v1173 = vunpack.c.l.b16 %v242
    %v1174 = vunpack.c.h.b16 %v242
    %v1175 = vunpack.c.l.b16 %v243
    %v1176 = vunpack.c.h.b16 %v243
    %v1177 = vunpack.c.l.b16 %v244
    %v1178 = vunpack.c.h.b16 %v244
    %v1179 = vunpack.c.l.b16 %v245
    %v1180 = vunpack.c.h.b16 %v245
    %v1181 = vunpack.c.l.b16 %v246
    %v1182 = vunpack.c.h.b16 %v246
    %v1183 = vunpack.c.l.b16 %v247
    %v1184 = vunpack.c.h.b16 %v247
    %v1185 = vunpack.c.l.b16 %v248
    %v1186 = vunpack.c.h.b16 %v248
    %v1187 = vunpack.c.l.b16 %v249
    %v1188 = vunpack.c.h.b16 %v249
    %v1189 = vunpack.c.l.b16 %v250
    %v1190 = vunpack.c.h.b16 %v250
    %v1191 = vunpack.c.l.b16 %v251
    %v1192 = vunpack.c.h.b16 %v251
    %v1193 = vunpack.c.l.b16 %v252
    %v1194 = vunpack.c.h.b16 %v252
    %v1195 = vunpack.c.l.b16 %v253
    %v1196 = vunpack.c.h.b16 %v253
    %v1197 = vunpack.c.l.b16 %v254
    %v1198 = vunpack.c.h.b16 %v254
    %v1199 = vunpack.c.l.b16 %v255
    %v1200 = vunpack.c.h.b16 %v255
    %v1201 = vunpack.c.l.b16 %v256
    %v1202 = vunpack.c.h.b16 %v256
    %v1203 = vunpack.c.l.b16 %v257
    %v1204 = vunpack.c.h.b16 %v257
    %v1205 = vunpack.c.l.b16 %v258
    %v1206 = vunpack.c.h.b16 %v258
    %v1207 = vunpack.c.l.b16 %v259
    %v1208 = vunpack.c.h.b16 %v259
    %v1209 = vunpack.c.l.b16 %v260
    %v1210 = vunpack.c.h.b16 %v260
    %v1211 = vunpack.c.l.b16 %v261
    %v1212 = vunpack.c.h.b16 %v261
    %v1213 = vunpack.c.l.b16 %v262
    %v1214 = vunpack.c.h.b16 %v262
    %v1215 = vunpack.c.l.b16 %v263
    %v1216 = vunpack.c.h.b16 %v263
    %v1217 = vunpack.c.l.b16 %v264
    %v1218 = vunpack.c.h.b16 %v264
    %v1219 = vunpack.c.l.b16 %v265
    %v1220 = vunpack.c.h.b16 %v265
    %v1221 = vunpack.c.l.b16 %v266
    %v1222 = vunpack.c.h.b16 %v266
    %v1223 = vunpack.c.l.b16 %v267
    %v1224 = vunpack.c.h.b16 %v267
    %v1225 = vunpack.c.l.b16 %v268
    %v1226 = vunpack.c.h.b16 %v268
    %v1227 = vunpack.c.l.b16 %v269
    %v1228 = vunpack.c.h.b16 %v269
    %v1229 = vunpack.c.l.b16 %v270
    %v1230 = vunpack.c.h.b16 %v270
    %v1231 = vunpack.c.l.b16 %v271
    %v1232 = vunpack.c.h.b16 %v271
    %v1233 = vunpack.c.l.b16 %v272
    %v1234 = vunpack.c.h.b16 %v272
    %v1235 = vunpack.c.l.b16 %v273
    %v1236 = vunpack.c.h.b16 %v273
    %v1237 = vunpack.c.l.b16 %v274
    %v1238 = vunpack.c.h.b16 %v274
    %v1239 = vunpack.c.l.b16 %v275
    %v1240 = vunpack.c.h.b16 %v275
    %v1241 = vunpack.c.l.b16 %v276
    %v1242 = vunpack.c.h.b16 %v276
    %v1243 = vunpack.c.l.b16 %v277
    %v1244 = vunpack.c.h.b16 %v277
    %v1245 = vunpack.c.l.b16 %v278
    %v1246 = vunpack.c.h.b16 %v278
    %v1247 = vunpack.c.l.b16 %v279
    %v1248 = vunpack.c.h.b16 %v279
    %v1249 = vunpack.c.l.b16 %v280
    %v1250 = vunpack.c.h.b16 %v280
    %v1251 = vunpack.c.l.b16 %v281
    %v1252 = vunpack.c.h.b16 %v281
    %v1253 = vunpack.c.l.b16 %v282
    %v1254 = vunpack.c.h.b16 %v282
    %v1255 = vunpack.c.l.b16 %v283
    %v1256 = vunpack.c.h.b16 %v283
    %v1257 = vunpack.c.l.b16 %v284
    %v1258 = vunpack.c.h.b16 %v284
    %v1259 = vunpack.c.l.b16 %v285
    %v1260 = vunpack.c.h.b16 %v285
    %v1261 = vunpack.c.l.b16 %v286
    %v1262 = vunpack.c.h.b16 %v286
    %v1263 = vunpack.c.l.b16 %v287
    %v1264 = vunpack.c.h.b16 %v287
    %v1265 = vunpack.c.l.b16 %v288
    %v1266 = vunpack.c.h.b16 %v288
    %v1267 = vunpack.c.l.b16 %v289
    %v1268 = vunpack.c.h.b16 %v289
    %v1269 = vunpack.c.l.b16 %v290
    %v1270 = vunpack.c.h.b16 %v290
    %v1271 = vunpack.c.l.b16 %v291
    %v1272 = vunpack.c.h.b16 %v291
    %v1273 = vunpack.c.l.b16 %v292
    %v1274 = vunpack.c.h.b16 %v292
    %v1275 = vunpack.c.l.b16 %v293
    %v1276 = vunpack.c.h.b16 %v293
    %v1277 = vunpack.c.l.b16 %v294
    %v1278 = vunpack.c.h.b16 %v294
    %v1279 = vunpack.c.l.b16 %v295
    %v1280 = vunpack.c.h.b16 %v295
    %v1281 = vunpack.c.l.b16 %v296
    %v1282 = vunpack.c.h.b16 %v296
    %v1283 = vunpack.c.l.b16 %v297
    %v1284 = vunpack.c.h.b16 %v297
    %v1285 = vunpack.c.l.b16 %v298
    %v1286 = vunpack.c.h.b16 %v298
    %v1287 = vunpack.c.l.b16 %v299
    %v1288 = vunpack.c.h.b16 %v299
    %v1289 = vunpack.c.l.b16 %v300
    %v1290 = vunpack.c.h.b16 %v300
    %v1291 = vunpack.c.l.b16 %v301
    %v1292 = vunpack.c.h.b16 %v301
    %v1293 = vunpack.c.l.b16 %v302
    %v1294 = vunpack.c.h.b16 %v302
    %v1295 = vunpack.c.l.b16 %v303
    %v1296 = vunpack.c.h.b16 %v303
    %v1297 = vunpack.c.l.b16 %v304
    %v1298 = vunpack.c.h.b16 %v304
    %v1299 = vunpack.c.l.b16 %v305
    %v1300 = vunpack.c.h.b16 %v305
    %v1301 = vunpack.c.l.b16 %v306
    %v1302 = vunpack.c.h.b16 %v306
    %v1303 = vunpack.c.l.b16 %v307
    %v1304 = vunpack.c.h.b16 %v307
    %v1305 = vunpack.c.l.b16 %v308
    %v1306 = vunpack.c.h.b16 %v308
    %v1307 = vunpack.c.l.b16 %v309
    %v1308 = vunpack.c.h.b16 %v309
    %v1309 = vunpack.c.l.b16 %v310
    %v1310 = vunpack.c.h.b16 %v310
    %v1311 = vunpack.c.l.b16 %v311
    %v1312 = vunpack.c.h.b16 %v311
    %v1313 = vunpack.c.l.b16 %v312
    %v1314 = vunpack.c.h.b16 %v312
    %v1315 = vunpack.c.l.b16 %v313
    %v1316 = vunpack.c.h.b16 %v313
    %v1317 = vunpack.c.l.b16 %v314
    %v1318 = vunpack.c.h.b16 %v314
    %v1319 = vunpack.c.l.b16 %v315
    %v1320 = vunpack.c.h.b16 %v315
    %v1321 = vunpack.c.l.b16 %v316
    %v1322 = vunpack.c.h.b16 %v316
    %v1323 = vunpack.c.l.b16 %v317
    %v1324 = vunpack.c.h.b16 %v317
    %v1325 = vunpack.c.l.b16 %v318
    %v1326 = vunpack.c.h.b16 %v318
    %v1327 = vunpack.c.l.b16 %v319
    %v1328 = vunpack.c.h.b16 %v319
    %v1329 = vunpack.c.l.b16 %v320
    %v1330 = vunpack.c.h.b16 %v320
    %v1331 = vunpack.c.l.b16 %v321
    %v1332 = vunpack.c.h.b16 %v321
    %v1333 = vunpack.c.l.b16 %v322
    %v1334 = vunpack.c.h.b16 %v322
    %v1335 = vunpack.c.l.b16 %v323
    %v1336 = vunpack.c.h.b16 %v323
    %v1337 = vunpack.c.l.b16 %v324
    %v1338 = vunpack.c.h.b16 %v324
    %v1339 = vunpack.c.l.b16 %v325
    %v1340 = vunpack.c.h.b16 %v325
    %v1341 = vunpack.c.l.b16 %v326
    %v1342 = vunpack.c.h.b16 %v326
    %v1343 = vunpack.c.l.b16 %v327
    %v1344 = vunpack.c.h.b16 %v327
    %v1345 = vunpack.c.l.b16 %v328
    %v1346 = vunpack.c.h.b16 %v328
    %v1347 = vunpack.c.l.b16 %v329
    %v1348 = vunpack.c.h.b16 %v329
    %v1349 = vunpack.c.l.b16 %v330
    %v1350 = vunpack.c.h.b16 %v330
    %v1351 = vunpack.c.l.b16 %v331
    %v1352 = vunpack.c.h.b16 %v331
    %v1353 = vunpack.c.l.b16 %v332
    %v1354 = vunpack.c.h.b16 %v332
    %v1355 = vunpack.c.l.b16 %v333
    %v1356 = vunpack.c.h.b16 %v333
    %v1357 = vunpack.c.l.b16 %v334
    %v1358 = vunpack.c.h.b16 %v334
    %v1359 = vunpack.c.l.b16 %v335
    %v1360 = vunpack.c.h.b16 %v335
    %v1361 = vunpack.c.l.b16 %v336
    %v1362 = vunpack.c.h.b16 %v336
    %v1363 = vunpack.c.l.b16 %v337
    %v1364 = vunpack.c.h.b16 %v337
    %v1365 = vunpack.c.l.b16 %v338
    %v1366 = vunpack.c.h.b16 %v338
    %v1367 = vunpack.c.l.b16 %v339
    %v1368 = vunpack.c.h.b16 %v339
    %v1369 = vunpack.c.l.b16 %v340
    %v1370 = vunpack.c.h.b16 %v340
    %v1371 = vunpack.c.l.b16 %v341
    %v1372 = vunpack.c.h.b16 %v341
    %v1373 = vunpack.c.l.b16 %v342
    %v1374 = vunpack.c.h.b16 %v342
    %v1375 = vunpack.c.l.b16 %v343
    %v1376 = vunpack.c.h.b16 %v343
    %v1377 = vunpack.c.l.b16 %v344
    %v1378 = vunpack.c.h.b16 %v344
    %v1379 = vunpack.c.l.b16 %v345
    %v1380 = vunpack.c.h.b16 %v345
    %v1381 = vunpack.c.l.b16 %v346
    %v1382 = vunpack.c.h.b16 %v346
    %v1383 = vunpack.c.l.b16 %v347
    %v1384 = vunpack.c.h.b16 %v347
    %v1385 = vunpack.c.l.b16 %v348
    %v1386 = vunpack.c.h.b16 %v348
    %v1387 = vunpack.c.l.b16 %v349
    %v1388 = vunpack.c.h.b16 %v349
    %v1389 = vunpack.c.l.b16 %v350
    %v1390 = vunpack.c.h.b16 %v350
    %v1391 = vunpack.c.l.b16 %v351
    %v1392 = vunpack.c.h.b16 %v351
    %v1393 = vunpack.c.l.b16 %v352
    %v1394 = vunpack.c.h.b16 %v352
    %v1395 = vunpack.c.l.b16 %v353
    %v1396 = vunpack.c.h.b16 %v353
    %v1397 = vunpack.c.l.b16 %v354
    %v1398 = vunpack.c.h.b16 %v354
    %v1399 = vunpack.c.l.b16 %v355
    %v1400 = vunpack.c.h.b16 %v355
    %v1401 = vunpack.c.l.b16 %v356
    %v1402 = vunpack.c.h.b16 %v356
    %v1403 = vunpack.c.l.b16 %v357
    %v1404 = vunpack.c.h.b16 %v357
    %v1405 = vunpack.c.l.b16 %v358
    %v1406 = vunpack.c.h.b16 %v358
    %v1407 = vunpack.c.l.b16 %v359
    %v1408 = vunpack.c.h.b16 %v359
    %v1409 = vunpack.c.l.b16 %v360
    %v1410 = vunpack.c.h.b16 %v360
    %v1411 = vunpack.c.l.b16 %v361
    %v1412 = vunpack.c.h.b16 %v361
    %v1413 = vunpack.c.l.b16 %v362
    %v1414 = vunpack.c.h.b16 %v362
    %v1415 = vunpack.c.l.b16 %v363
    %v1416 = vunpack.c.h.b16 %v363
    %v1417 = vunpack.c.l.b16 %v364
    %v1418 = vunpack.c.h.b16 %v364
    %v1419 = vunpack.c.l.b16 %v365
    %v1420 = vunpack.c.h.b16 %v365
    %v1421 = vunpack.c.l.b16 %v366
    %v1422 = vunpack.c.h.b16 %v366
    %v1423 = vunpack.c.l.b16 %v367
    %v1424 = vunpack.c.h.b16 %v367
    %v1425 = vunpack.c.l.b16 %v368
    %v1426 = vunpack.c.h.b16 %v368
    %v1427 = vunpack.c.l.b16 %v369
    %v1428 = vunpack.c.h.b16 %v369
    %v1429 = vunpack.c.l.b16 %v370
    %v1430 = vunpack.c.h.b16 %v370
    %v1431 = vunpack.c.l.b16 %v371
    %v1432 = vunpack.c.h.b16 %v371
    %v1433 = vunpack.c.l.b16 %v372
    %v1434 = vunpack.c.h.b16 %v372
    %v1435 = vunpack.c.l.b16 %v373
    %v1436 = vunpack.c.h.b16 %v373
    %v1437 = vunpack.c.l.b16 %v374
    %v1438 = vunpack.c.h.b16 %v374
    %v1439 = vunpack.c.l.b16 %v375
    %v1440 = vunpack.c.h.b16 %v375
    %v1441 = vunpack.c.l.b16 %v376
    %v1442 = vunpack.c.h.b16 %v376
    %v1443 = vunpack.c.l.b16 %v377
    %v1444 = vunpack.c.h.b16 %v377
    %v1445 = vunpack.c.l.b16 %v378
    %v1446 = vunpack.c.h.b16 %v378
    %v1447 = vunpack.c.l.b16 %v379
    %v1448 = vunpack.c.h.b16 %v379
    %v1449 = vunpack.c.l.b16 %v380
    %v1450 = vunpack.c.h.b16 %v380
    %v1451 = vunpack.c.l.b16 %v381
    %v1452 = vunpack.c.h.b16 %v381
    %v1453 = vunpack.c.l.b16 %v382
    %v1454 = vunpack.c.h.b16 %v382
    %v1455 = vunpack.c.l.b16 %v383
    %v1456 = vunpack.c.h.b16 %v383
    %v1457 = vunpack.c.l.b16 %v384
    %v1458 = vunpack.c.h.b16 %v384
    %v1459 = vunpack.c.l.b16 %v385
    %v1460 = vunpack.c.h.b16 %v385
    %v1461 = vunpack.c.l.b16 %v386
    %v1462 = vunpack.c.h.b16 %v386
    %v1463 = vunpack.c.l.b16 %v387
    %v1464 = vunpack.c.h.b16 %v387
    %v1465 = vunpack.c.l.b16 %v388
    %v1466 = vunpack.c.h.b16 %v388
    %v1467 = vunpack.c.l.b16 %v389
    %v1468 = vunpack.c.h.b16 %v389
    %v1469 = vunpack.c.l.b16 %v390
    %v1470 = vunpack.c.h.b16 %v390
    %v1471 = vunpack.c.l.b16 %v391
    %v1472 = vunpack.c.h.b16 %v391
    %v1473 = vunpack.c.l.b16 %v392
    %v1474 = vunpack.c.h.b16 %v392
    %v1475 = vunpack.c.l.b16 %v393
    %v1476 = vunpack.c.h.b16 %v393
    %v1477 = vunpack.c.l.b16 %v394
    %v1478 = vunpack.c.h.b16 %v394
    %v1479 = vunpack.c.l.b16 %v395
    %v1480 = vunpack.c.h.b16 %v395
    %v1481 = vunpack.c.l.b16 %v396
    %v1482 = vunpack.c.h.b16 %v396
    %v1483 = vunpack.c.l.b16 %v397
    %v1484 = vunpack.c.h.b16 %v397
    %v1485 = vunpack.c.l.b16 %v398
    %v1486 = vunpack.c.h.b16 %v398
    %v1487 = vunpack.c.l.b16 %v399
    %v1488 = vunpack.c.h.b16 %v399
    %v1489 = vunpack.c.l.b16 %v400
    %v1490 = vunpack.c.h.b16 %v400
    %v1491 = vunpack.c.l.b16 %v401
    %v1492 = vunpack.c.h.b16 %v401
    %v1493 = vunpack.c.l.b16 %v402
    %v1494 = vunpack.c.h.b16 %v402
    %v1495 = vunpack.c.l.b16 %v403
    %v1496 = vunpack.c.h.b16 %v403
    %v1497 = vunpack.c.l.b16 %v404
    %v1498 = vunpack.c.h.b16 %v404
    %v1499 = vunpack.c.l.b16 %v405
    %v1500 = vunpack.c.h.b16 %v405
    %v1501 = vunpack.c.l.b16 %v406
    %v1502 = vunpack.c.h.b16 %v406
    %v1503 = vunpack.c.l.b16 %v407
    %v1504 = vunpack.c.h.b16 %v407
    %v1505 = vunpack.c.l.b16 %v408
    %v1506 = vunpack.c.h.b16 %v408
    %v1507 = vunpack.c.l.b16 %v409
    %v1508 = vunpack.c.h.b16 %v409
    %v1509 = vunpack.c.l.b16 %v410
    %v1510 = vunpack.c.h.b16 %v410
    %v1511 = vunpack.c.l.b16 %v411
    %v1512 = vunpack.c.h.b16 %v411
    %v1513 = vunpack.c.l.b16 %v412
    %v1514 = vunpack.c.h.b16 %v412
    %v1515 = vunpack.c.l.b16 %v413
    %v1516 = vunpack.c.h.b16 %v413
    %v1517 = vunpack.c.l.b16 %v414
    %v1518 = vunpack.c.h.b16 %v414
    %v1519 = vunpack.c.l.b16 %v415
    %v1520 = vunpack.c.h.b16 %v415
    %v1521 = vunpack.c.l.b16 %v416
    %v1522 = vunpack.c.h.b16 %v416
    %v1523 = vunpack.c.l.b16 %v417
    %v1524 = vunpack.c.h.b16 %v417
    %v1525 = vunpack.c.l.b16 %v418
    %v1526 = vunpack.c.h.b16 %v418
    %v1527 = vunpack.c.l.b16 %v419
    %v1528 = vunpack.c.h.b16 %v419
    %v1529 = vunpack.c.l.b16 %v420
    %v1530 = vunpack.c.h.b16 %v420
    %v1531 = vunpack.c.l.b16 %v421
    %v1532 = vunpack.c.h.b16 %v421
    %v1533 = vunpack.c.l.b16 %v422
    %v1534 = vunpack.c.h.b16 %v422
    %v1535 = vunpack.c.l.b16 %v423
    %v1536 = vunpack.c.h.b16 %v423
    %v1537 = vunpack.c.l.b16 %v424
    %v1538 = vunpack.c.h.b16 %v424
    %v1539 = vunpack.c.l.b16 %v425
    %v1540 = vunpack.c.h.b16 %v425
    %v1541 = vunpack.c.l.b16 %v426
    %v1542 = vunpack.c.h.b16 %v426
    %v1543 = vunpack.c.l.b16 %v427
    %v1544 = vunpack.c.h.b16 %v427
    %v1545 = vunpack.c.l.b16 %v428
    %v1546 = vunpack.c.h.b16 %v428
    %v1547 = vunpack.c.l.b16 %v429
    %v1548 = vunpack.c.h.b16 %v429
    %v1549 = vunpack.c.l.b16 %v430
    %v1550 = vunpack.c.h.b16 %v430
    %v1551 = vunpack.c.l.b16 %v431
    %v1552 = vunpack.c.h.b16 %v431
    %v1553 = vunpack.c.l.b16 %v432
    %v1554 = vunpack.c.h.b16 %v432
    %v1555 = vunpack.c.l.b16 %v433
    %v1556 = vunpack.c.h.b16 %v433
    %v1557 = vunpack.c.l.b16 %v434
    %v1558 = vunpack.c.h.b16 %v434
    %v1559 = vunpack.c.l.b16 %v435
    %v1560 = vunpack.c.h.b16 %v435
    %v1561 = vunpack.c.l.b16 %v436
    %v1562 = vunpack.c.h.b16 %v436
    %v1563 = vunpack.c.l.b16 %v437
    %v1564 = vunpack.c.h.b16 %v437
    %v1565 = vunpack.c.l.b16 %v438
    %v1566 = vunpack.c.h.b16 %v438
    %v1567 = vunpack.c.l.b16 %v439
    %v1568 = vunpack.c.h.b16 %v439
    %v1569 = vunpack.c.l.b16 %v440
    %v1570 = vunpack.c.h.b16 %v440
    %v1571 = vunpack.c.l.b16 %v441
    %v1572 = vunpack.c.h.b16 %v441
    %v1573 = vunpack.c.l.b16 %v442
    %v1574 = vunpack.c.h.b16 %v442
    %v1575 = vunpack.c.l.b16 %v443
    %v1576 = vunpack.c.h.b16 %v443
    %v1577 = vunpack.c.l.b16 %v444
    %v1578 = vunpack.c.h.b16 %v444
    %v1579 = vunpack.c.l.b16 %v445
    %v1580 = vunpack.c.h.b16 %v445
    %v1581 = vunpack.c.l.b16 %v446
    %v1582 = vunpack.c.h.b16 %v446
    %v1583 = vunpack.c.l.b16 %v447
    %v1584 = vunpack.c.h.b16 %v447
    %v1585 = vunpack.c.l.b16 %v448
    %v1586 = vunpack.c.h.b16 %v448
    %v1587 = vunpack.c.l.b16 %v449
    %v1588 = vunpack.c.h.b16 %v449
    %v1589 = vunpack.c.l.b16 %v450
    %v1590 = vunpack.c.h.b16 %v450
    %v1591 = vunpack.c.l.b16 %v451
    %v1592 = vunpack.c.h.b16 %v451
    %v1593 = vunpack.c.l.b16 %v452
    %v1594 = vunpack.c.h.b16 %v452
    %v1595 = vunpack.c.l.b16 %v453
    %v1596 = vunpack.c.h.b16 %v453
    %v1597 = vunpack.c.l.b16 %v454
    %v1598 = vunpack.c.h.b16 %v454
    %v1599 = vunpack.c.l.b16 %v455
    %v1600 = vunpack.c.h.b16 %v455
    %v1601 = vunpack.c.l.b16 %v456
    %v1602 = vunpack.c.h.b16 %v456
    %v1603 = vunpack.c.l.b16 %v457
    %v1604 = vunpack.c.h.b16 %v457
    %v1605 = vunpack.c.l.b16 %v458
    %v1606 = vunpack.c.h.b16 %v458
    %v1607 = vunpack.c.l.b16 %v459
    %v1608 = vunpack.c.h.b16 %v459
    %v1609 = vunpack.c.l.b16 %v460
    %v1610 = vunpack.c.h.b16 %v460
    %v1611 = vunpack.c.l.b16 %v461
    %v1612 = vunpack.c.h.b16 %v461
    %v1613 = vunpack.c.l.b16 %v462
    %v1614 = vunpack.c.h.b16 %v462
    %v1615 = vpack.c.b16 %v853, %v847
    %v1616 = vpack.c.b16 %v854, %v848
    %v1617 = vpack.c.b16 %v855, %v849
    %v1618 = vpack.c.b16 %v856, %v850
    %v1619 = vpack.c.b16 %v857, %v851
    %v1620 = vpack.c.b16 %v858, %v852
    %v1621 = vpack.c.b16 %v865, %v859
    %v1622 = vpack.c.b16 %v866, %v860
    %v1623 = vpack.c.b16 %v867, %v861
    %v1624 = vpack.c.b16 %v868, %v862
    %v1625 = vpack.c.b16 %v869, %v863
    %v1626 = vpack.c.b16 %v870, %v864
    %v1627 = vpack.c.b16 %v877, %v871
    %v1628 = vpack.c.b16 %v878, %v872
    %v1629 = vpack.c.b16 %v879, %v873
    %v1630 = vpack.c.b16 %v880, %v874
    %v1631 = vpack.c.b16 %v881, %v875
    %v1632 = vpack.c.b16 %v882, %v876
    %v1633 = vpack.c.b16 %v889, %v883
    %v1634 = vpack.c.b16 %v890, %v884
    %v1635 = vpack.c.b16 %v891, %v885
    %v1636 = vpack.c.b16 %v892, %v886
    %v1637 = vpack.c.b16 %v893, %v887
    %v1638 = vpack.c.b16 %v894, %v888
    %v1639 = vpack.c.b16 %v901, %v895
    %v1640 = vpack.c.b16 %v902, %v896
    %v1641 = vpack.c.b16 %v903, %v897
    %v1642 = vpack.c.b16 %v904, %v898
    %v1643 = vpack.c.b16 %v905, %v899
    %v1644 = vpack.c.b16 %v906, %v900
    %v1645 = vpack.c.b16 %v913, %v907
    %v1646 = vpack.c.b16 %v914, %v908
    %v1647 = vpack.c.b16 %v915, %v909
    %v1648 = vpack.c.b16 %v916, %v910
    %v1649 = vpack.c.b16 %v917, %v911
    %v1650 = vpack.c.b16 %v918, %v912
    %v1651 = vpack.c.b16 %v925, %v919
    %v1652 = vpack.c.b16 %v926, %v920
    %v1653 = vpack.c.b16 %v927, %v921
    %v1654 = vpack.c.b16 %v928, %v922
    %v1655 = vpack.c.b16 %v929, %v923
    %v1656 = vpack.c.b16 %v930, %v924
    %v1657 = vpack.c.b16 %v937, %v931
    %v1658 = vpack.c.b16 %v938, %v932
    %v1659 = vpack.c.b16 %v939, %v933
    %v1660 = vpack.c.b16 %v940, %v934
    %v1661 = vpack.c.b16 %v941, %v935
    %v1662 = vpack.c.b16 %v942, %v936
    %v1663 = vpack.c.b16 %v949, %v943
    %v1664 = vpack.c.b16 %v950, %v944
    %v1665 = vpack.c.b16 %v951, %v945
    %v1666 = vpack.c.b16 %v952, %v946
    %v1667 = vpack.c.b16 %v953, %v947
    %v1668 = vpack.c.b16 %v954, %v948
    %v1669 = vpack.c.b16 %v961, %v955
    %v1670 = vpack.c.b16 %v962, %v956
    %v1671 = vpack.c.b16 %v963, %v957
    %v1672 = vpack.c.b16 %v964, %v958
    %v1673 = vpack.c.b16 %v965, %v959
    %v1674 = vpack.c.b16 %v966, %v960
    %v1675 = vpack.c.b16 %v973, %v967
    %v1676 = vpack.c.b16 %v974, %v968
    %v1677 = vpack.c.b16 %v975, %v969
    %v1678 = vpack.c.b16 %v976, %v970
    %v1679 = vpack.c.b16 %v977, %v971
    %v1680 = vpack.c.b16 %v978, %v972
    %v1681 = vpack.c.b16 %v985, %v979
    %v1682 = vpack.c.b16 %v986, %v980
    %v1683 = vpack.c.b16 %v987, %v981
    %v1684 = vpack.c.b16 %v988, %v982
    %v1685 = vpack.c.b16 %v989, %v983
    %v1686 = vpack.c.b16 %v990, %v984
    %v1687 = vpack.c.b16 %v997, %v991
    %v1688 = vpack.c.b16 %v998, %v992
    %v1689 = vpack.c.b16 %v999, %v993
    %v1690 = vpack.c.b16 %v1000, %v994
    %v1691 = vpack.c.b16 %v1001, %v995
    %v1692 = vpack.c.b16 %v1002, %v996
    %v1693 = vpack.c.b16 %v1009, %v1003
    %v1694 = vpack.c.b16 %v1010, %v1004
    %v1695 = vpack.c.b16 %v1011, %v1005
    %v1696 = vpack.c.b16 %v1012, %v1006
    %v1697 = vpack.c.b16 %v1013, %v1007
    %v1698 = vpack.c.b16 %v1014, %v1008
    %v1699 = vpack.c.b16 %v1021, %v1015
    %v1700 = vpack.c.b16 %v1022, %v1016
    %v1701 = vpack.c.b16 %v1023, %v1017
    %v1702 = vpack.c.b16 %v1024, %v1018
    %v1703 = vpack.c.b16 %v1025, %v1019
    %v1704 = vpack.c.b16 %v1026, %v1020
    %v1705 = vpack.c.b16 %v1033, %v1027
    %v1706 = vpack.c.b16 %v1034, %v1028
    %v1707 = vpack.c.b16 %v1035, %v1029
    %v1708 = vpack.c.b16 %v1036, %v1030
    %v1709 = vpack.c.b16 %v1037, %v1031
    %v1710 = vpack.c.b16 %v1038, %v1032
    %v1711 = vpack.c.b16 %v1045, %v1039
    %v1712 = vpack.c.b16 %v1046, %v1040
    %v1713 = vpack.c.b16 %v1047, %v1041
    %v1714 = vpack.c.b16 %v1048, %v1042
    %v1715 = vpack.c.b16 %v1049, %v1043
    %v1716 = vpack.c.b16 %v1050, %v1044
    %v1717 = vpack.c.b16 %v1057, %v1051
    %v1718 = vpack.c.b16 %v1058, %v1052
    %v1719 = vpack.c.b16 %v1059, %v1053
    %v1720 = vpack.c.b16 %v1060, %v1054
    %v1721 = vpack.c.b16 %v1061, %v1055
    %v1722 = vpack.c.b16 %v1062, %v1056
    %v1723 = vpack.c.b16 %v1069, %v1063
    %v1724 = vpack.c.b16 %v1070, %v1064
    %v1725 = vpack.c.b16 %v1071, %v1065
    %v1726 = vpack.c.b16 %v1072, %v1066
    %v1727 = vpack.c.b16 %v1073, %v1067
    %v1728 = vpack.c.b16 %v1074, %v1068
    %v1729 = vpack.c.b16 %v1081, %v1075
    %v1730 = vpack.c.b16 %v1082, %v1076
    %v1731 = vpack.c.b16 %v1083, %v1077
    %v1732 = vpack.c.b16 %v1084, %v1078
    %v1733 = vpack.c.b16 %v1085, %v1079
    %v1734 = vpack.c.b16 %v1086, %v1080
    %v1735 = vpack.c.b16 %v1093, %v1087
    %v1736 = vpack.c.b16 %v1094, %v1088
    %v1737 = vpack.c.b16 %v1095, %v1089
    %v1738 = vpack.c.b16 %v1096, %v1090
    %v1739 = vpack.c.b16 %v1097, %v1091
    %v1740 = vpack.c.b16 %v1098, %v1092
    %v1741 = vpack.c.b16 %v1105, %v1099
    %v1742 = vpack.c.b16 %v1106, %v1100
    %v1743 = vpack.c.b16 %v1107, %v1101
    %v1744 = vpack.c.b16 %v1108, %v1102
    %v1745 = vpack.c.b16 %v1109, %v1103
    %v1746 = vpack.c.b16 %v1110, %v1104
    %v1747 = vpack.c.b16 %v1117, %v1111
    %v1748 = vpack.c.b16 %v1118, %v1112
    %v1749 = vpack.c.b16 %v1119, %v1113
    %v1750 = vpack.c.b16 %v1120, %v1114
    %v1751 = vpack.c.b16 %v1121, %v1115
    %v1752 = vpack.c.b16 %v1122, %v1116
    %v1753 = vpack.c.b16 %v1129, %v1123
    %v1754 = vpack.c.b16 %v1130, %v1124
    %v1755 = vpack.c.b16 %v1131, %v1125
    %v1756 = vpack.c.b16 %v1132, %v1126
    %v1757 = vpack.c.b16 %v1133, %v1127
    %v1758 = vpack.c.b16 %v1134, %v1128
    %v1759 = vpack.c.b16 %v1141, %v1135
    %v1760 = vpack.c.b16 %v1142, %v1136
    %v1761 = vpack.c.b16 %v1143, %v1137
    %v1762 = vpack.c.b16 %v1144, %v1138
    %v1763 = vpack.c.b16 %v1145, %v1139
    %v1764 = vpack.c.b16 %v1146, %v1140
    %v1765 = vpack.c.b16 %v1153, %v1147
    %v1766 = vpack.c.b16 %v1154, %v1148
    %v1767 = vpack.c.b16 %v1155, %v1149
    %v1768 = vpack.c.b16 %v1156, %v1150
    %v1769 = vpack.c.b16 %v1157, %v1151
    %v1770 = vpack.c.b16 %v1158, %v1152
    %v1771 = vpack.c.b16 %v1165, %v1159
    %v1772 = vpack.c.b16 %v1166, %v1160
    %v1773 = vpack.c.b16 %v1167, %v1161
    %v1774 = vpack.c.b16 %v1168, %v1162
    %v1775 = vpack.c.b16 %v1169, %v1163
    %v1776 = vpack.c.b16 %v1170, %v1164
    %v1777 = vpack.c.b16 %v1177, %v1171
    %v1778 = vpack.c.b16 %v1178, %v1172
    %v1779 = vpack.c.b16 %v1179, %v1173
    %v1780 = vpack.c.b16 %v1180, %v1174
    %v1781 = vpack.c.b16 %v1181, %v1175
    %v1782 = vpack.c.b16 %v1182, %v1176
    %v1783 = vpack.c.b16 %v1189, %v1183
    %v1784 = vpack.c.b16 %v1190, %v1184
    %v1785 = vpack.c.b16 %v1191, %v1185
    %v1786 = vpack.c.b16 %v1192, %v1186
    %v1787 = vpack.c.b16 %v1193, %v1187
    %v1788 = vpack.c.b16 %v1194, %v1188
    %v1789 = vpack.c.b16 %v1201, %v1195
    %v1790 = vpack.c.b16 %v1202, %v1196
    %v1791 = vpack.c.b16 %v1203, %v1197
    %v1792 = vpack.c.b16 %v1204, %v1198
    %v1793 = vpack.c.b16 %v1205, %v1199
    %v1794 = vpack.c.b16 %v1206, %v1200
    %v1795 = vpack.c.b16 %v1213, %v1207
    %v1796 = vpack.c.b16 %v1214, %v1208
    %v1797 = vpack.c.b16 %v1215, %v1209
    %v1798 = vpack.c.b16 %v1216, %v1210
    %v1799 = vpack.c.b16 %v1217, %v1211
    %v1800 = vpack.c.b16 %v1218, %v1212
    %v1801 = vpack.c.b16 %v1225, %v1219
    %v1802 = vpack.c.b16 %v1226, %v1220
    %v1803 = vpack.c.b16 %v1227, %v1221
    %v1804 = vpack.c.b16 %v1228, %v1222
    %v1805 = vpack.c.b16 %v1229, %v1223
    %v1806 = vpack.c.b16 %v1230, %v1224
    %v1807 = vpack.c.b16 %v1237, %v1231
    %v1808 = vpack.c.b16 %v1238, %v1232
    %v1809 = vpack.c.b16 %v1239, %v1233
    %v1810 = vpack.c.b16 %v1240, %v1234
    %v1811 = vpack.c.b16 %v1241, %v1235
    %v1812 = vpack.c.b16 %v1242, %v1236
    %v1813 = vpack.c.b16 %v1249, %v1243
    %v1814 = vpack.c.b16 %v1250, %v1244
    %v1815 = vpack.c.b16 %v1251, %v1245
    %v1816 = vpack.c.b16 %v1252, %v1246
    %v1817 = vpack.c.b16 %v1253, %v1247
    %v1818 = vpack.c.b16 %v1254, %v1248
    %v1819 = vpack.c.b16 %v1261, %v1255
    %v1820 = vpack.c.b16 %v1262, %v1256
    %v1821 = vpack.c.b16 %v1263, %v1257
    %v1822 = vpack.c.b16 %v1264, %v1258
    %v1823 = vpack.c.b16 %v1265, %v1259
    %v1824 = vpack.c.b16 %v1266, %v1260
    %v1825 = vpack.c.b16 %v1273, %v1267
    %v1826 = vpack.c.b16 %v1274, %v1268
    %v1827 = vpack.c.b16 %v1275, %v1269
    %v1828 = vpack.c.b16 %v1276, %v1270
    %v1829 = vpack.c.b16 %v1277, %v1271
    %v1830 = vpack.c.b16 %v1278, %v1272
    %v1831 = vpack.c.b16 %v1285, %v1279
    %v1832 = vpack.c.b16 %v1286, %v1280
    %v1833 = vpack.c.b16 %v1287, %v1281
    %v1834 = vpack.c.b16 %v1288, %v1282
    %v1835 = vpack.c.b16 %v1289, %v1283
    %v1836 = vpack.c.b16 %v1290, %v1284
    %v1837 = vpack.c.b16 %v1297, %v1291
    %v1838 = vpack.c.b16 %v1298, %v1292
    %v1839 = vpack.c.b16 %v1299, %v1293
    %v1840 = vpack.c.b16 %v1300, %v1294
    %v1841 = vpack.c.b16 %v1301, %v1295
    %v1842 = vpack.c.b16 %v1302, %v1296
    %v1843 = vpack.c.b16 %v1309, %v1303
    %v1844 = vpack.c.b16 %v1310, %v1304
    %v1845 = vpack.c.b16 %v1311, %v1305
    %v1846 = vpack.c.b16 %v1312, %v1306
    %v1847 = vpack.c.b16 %v1313, %v1307
    %v1848 = vpack.c.b16 %v1314, %v1308
    %v1849 = vpack.c.b16 %v1321, %v1315
    %v1850 = vpack.c.b16 %v1322, %v1316
    %v1851 = vpack.c.b16 %v1323, %v1317
    %v1852 = vpack.c.b16 %v1324, %v1318
    %v1853 = vpack.c.b16 %v1325, %v1319
    %v1854 = vpack.c.b16 %v1326, %v1320
    %v1855 = vpack.c.b16 %v1333, %v1327
    %v1856 = vpack.c.b16 %v1334, %v1328
    %v1857 = vpack.c.b16 %v1335, %v1329
    %v1858 = vpack.c.b16 %v1336, %v1330
    %v1859 = vpack.c.b16 %v1337, %v1331
    %v1860 = vpack.c.b16 %v1338, %v1332
    %v1861 = vpack.c.b16 %v1345, %v1339
    %v1862 = vpack.c.b16 %v1346, %v1340
    %v1863 = vpack.c.b16 %v1347, %v1341
    %v1864 = vpack.c.b16 %v1348, %v1342
    %v1865 = vpack.c.b16 %v1349, %v1343
    %v1866 = vpack.c.b16 %v1350, %v1344
    %v1867 = vpack.c.b16 %v1357, %v1351
    %v1868 = vpack.c.b16 %v1358, %v1352
    %v1869 = vpack.c.b16 %v1359, %v1353
    %v1870 = vpack.c.b16 %v1360, %v1354
    %v1871 = vpack.c.b16 %v1361, %v1355
    %v1872 = vpack.c.b16 %v1362, %v1356
    %v1873 = vpack.c.b16 %v1369, %v1363
    %v1874 = vpack.c.b16 %v1370, %v1364
    %v1875 = vpack.c.b16 %v1371, %v1365
    %v1876 = vpack.c.b16 %v1372, %v1366
    %v1877 = vpack.c.b16 %v1373, %v1367
    %v1878 = vpack.c.b16 %v1374, %v1368
    %v1879 = vpack.c.b16 %v1381, %v1375
    %v1880 = vpack.c.b16 %v1382, %v1376
    %v1881 = vpack.c.b16 %v1383, %v1377
    %v1882 = vpack.c.b16 %v1384, %v1378
    %v1883 = vpack.c.b16 %v1385, %v1379
    %v1884 = vpack.c.b16 %v1386, %v1380
    %v1885 = vpack.c.b16 %v1393, %v1387
    %v1886 = vpack.c.b16 %v1394, %v1388
    %v1887 = vpack.c.b16 %v1395, %v1389
    %v1888 = vpack.c.b16 %v1396, %v1390
    %v1889 = vpack.c.b16 %v1397, %v1391
    %v1890 = vpack.c.b16 %v1398, %v1392
    %v1891 = vpack.c.b16 %v1405, %v1399
    %v1892 = vpack.c.b16 %v1406, %v1400
    %v1893 = vpack.c.b16 %v1407, %v1401
    %v1894 = vpack.c.b16 %v1408, %v1402
    %v1895 = vpack.c.b16 %v1409, %v1403
    %v1896 = vpack.c.b16 %v1410, %v1404
    %v1897 = vpack.c.b16 %v1417, %v1411
    %v1898 = vpack.c.b16 %v1418, %v1412
    %v1899 = vpack.c.b16 %v1419, %v1413
    %v1900 = vpack.c.b16 %v1420, %v1414
    %v1901 = vpack.c.b16 %v1421, %v1415
    %v1902 = vpack.c.b16 %v1422, %v1416
    %v1903 = vpack.c.b16 %v1429, %v1423
    %v1904 = vpack.c.b16 %v1430, %v1424
    %v1905 = vpack.c.b16 %v1431, %v1425
    %v1906 = vpack.c.b16 %v1432, %v1426
    %v1907 = vpack.c.b16 %v1433, %v1427
    %v1908 = vpack.c.b16 %v1434, %v1428
    %v1909 = vpack.c.b16 %v1441, %v1435
    %v1910 = vpack.c.b16 %v1442, %v1436
    %v1911 = vpack.c.b16 %v1443, %v1437
    %v1912 = vpack.c.b16 %v1444, %v1438
    %v1913 = vpack.c.b16 %v1445, %v1439
    %v1914 = vpack.c.b16 %v1446, %v1440
    %v1915 = vpack.c.b16 %v1453, %v1447
    %v1916 = vpack.c.b16 %v1454, %v1448
    %v1917 = vpack.c.b16 %v1455, %v1449
    %v1918 = vpack.c.b16 %v1456, %v1450
    %v1919 = vpack.c.b16 %v1457, %v1451
    %v1920 = vpack.c.b16 %v1458, %v1452
    %v1921 = vpack.c.b16 %v1465, %v1459
    %v1922 = vpack.c.b16 %v1466, %v1460
    %v1923 = vpack.c.b16 %v1467, %v1461
    %v1924 = vpack.c.b16 %v1468, %v1462
    %v1925 = vpack.c.b16 %v1469, %v1463
    %v1926 = vpack.c.b16 %v1470, %v1464
    %v1927 = vpack.c.b16 %v1477, %v1471
    %v1928 = vpack.c.b16 %v1478, %v1472
    %v1929 = vpack.c.b16 %v1479, %v1473
    %v1930 = vpack.c.b16 %v1480, %v1474
    %v1931 = vpack.c.b16 %v1481, %v1475
    %v1932 = vpack.c.b16 %v1482, %v1476
    %v1933 = vpack.c.b16 %v1489, %v1483
    %v1934 = vpack.c.b16 %v1490, %v1484
    %v1935 = vpack.c.b16 %v1491, %v1485
    %v1936 = vpack.c.b16 %v1492, %v1486
    %v1937 = vpack.c.b16 %v1493, %v1487
    %v1938 = vpack.c.b16 %v1494, %v1488
    %v1939 = vpack.c.b16 %v1501, %v1495
    %v1940 = vpack.c.b16 %v1502, %v1496
    %v1941 = vpack.c.b16 %v1503, %v1497
    %v1942 = vpack.c.b16 %v1504, %v1498
    %v1943 = vpack.c.b16 %v1505, %v1499
    %v1944 = vpack.c.b16 %v1506, %v1500
    %v1945 = vpack.c.b16 %v1513, %v1507
    %v1946 = vpack.c.b16 %v1514, %v1508
    %v1947 = vpack.c.b16 %v1515, %v1509
    %v1948 = vpack.c.b16 %v1516, %v1510
    %v1949 = vpack.c.b16 %v1517, %v1511
    %v1950 = vpack.c.b16 %v1518, %v1512
    %v1951 = vpack.c.b16 %v1525, %v1519
    %v1952 = vpack.c.b16 %v1526, %v1520
    %v1953 = vpack.c.b16 %v1527, %v1521
    %v1954 = vpack.c.b16 %v1528, %v1522
    %v1955 = vpack.c.b16 %v1529, %v1523
    %v1956 = vpack.c.b16 %v1530, %v1524
    %v1957 = vpack.c.b16 %v1537, %v1531
    %v1958 = vpack.c.b16 %v1538, %v1532
    %v1959 = vpack.c.b16 %v1539, %v1533
    %v1960 = vpack.c.b16 %v1540, %v1534
    %v1961 = vpack.c.b16 %v1541, %v1535
    %v1962 = vpack.c.b16 %v1542, %v1536
    %v1963 = vpack.c.b16 %v1549, %v1543
    %v1964 = vpack.c.b16 %v1550, %v1544
    %v1965 = vpack.c.b16 %v1551, %v1545
    %v1966 = vpack.c.b16 %v1552, %v1546
    %v1967 = vpack.c.b16 %v1553, %v1547
    %v1968 = vpack.c.b16 %v1554, %v1548
    %v1969 = vpack.c.b16 %v1561, %v1555
    %v1970 = vpack.c.b16 %v1562, %v1556
    %v1971 = vpack.c.b16 %v1563, %v1557
    %v1972 = vpack.c.b16 %v1564, %v1558
    %v1973 = vpack.c.b16 %v1565, %v1559
    %v1974 = vpack.c.b16 %v1566, %v1560
    %v1975 = vpack.c.b16 %v1573, %v1567
    %v1976 = vpack.c.b16 %v1574, %v1568
    %v1977 = vpack.c.b16 %v1575, %v1569
    %v1978 = vpack.c.b16 %v1576, %v1570
    %v1979 = vpack.c.b16 %v1577, %v1571
    %v1980 = vpack.c.b16 %v1578, %v1572
    %v1981 = vpack.c.b16 %v1585, %v1579
    %v1982 = vpack.c.b16 %v1586, %v1580
    %v1983 = vpack.c.b16 %v1587, %v1581
    %v1984 = vpack.c.b16 %v1588, %v1582
    %v1985 = vpack.c.b16 %v1589, %v1583
    %v1986 = vpack.c.b16 %v1590, %v1584
    %v1987 = vpack.c.b16 %v1597, %v1591
    %v1988 = vpack.c.b16 %v1598, %v1592
    %v1989 = vpack.c.b16 %v1599, %v1593
    %v1990 = vpack.c.b16 %v1600, %v1594
    %v1991 = vpack.c.b16 %v1601, %v1595
    %v1992 = vpack.c.b16 %v1602, %v1596
    %v1993 = vpack.c.b16 %v1609, %v1603
    %v1994 = vpack.c.b16 %v1610, %v1604
    %v1995 = vpack.c.b16 %v1611, %v1605
    %v1996 = vpack.c.b16 %v1612, %v1606
    %v1997 = vpack.c.b16 %v1613, %v1607
    %v1998 = vpack.c.b16 %v1614, %v1608
    %2383 = vmatprep.subr.bf16.mxu0 %v1616
    %2384 = vmatpush1.bf16.msra.mxu0 %v1615
    %2385 = vmatprep.subr.bf16.mxu0 %v1622
    %2386 = vmatpush1.bf16.msra.mxu0 %v1621
    %2387 = vmatprep.subr.bf16.mxu0 %v1628
    %2388 = vmatpush1.bf16.msra.mxu0 %v1627
    %2389 = vmatprep.subr.bf16.mxu0 %v1634
    %2390 = vmatpush1.bf16.msra.mxu0 %v1633
    %2391 = vmatprep.subr.bf16.mxu0 %v1640
    %2392 = vmatpush1.bf16.msra.mxu0 %v1639
    %2393 = vmatprep.subr.bf16.mxu0 %v1646
    %2394 = vmatpush1.bf16.msra.mxu0 %v1645
    %2395 = vmatprep.subr.bf16.mxu0 %v1652
    %2396 = vmatpush1.bf16.msra.mxu0 %v1651
    %2397 = vmatprep.subr.bf16.mxu0 %v1658
    %2398 = vmatpush1.bf16.msra.mxu0 %v1657
    %2399 = vmatprep.subr.bf16.mxu0 %v1664
    %2400 = vmatpush1.bf16.msra.mxu0 %v1663
    %2401 = vmatprep.subr.bf16.mxu0 %v1670
    %2402 = vmatpush1.bf16.msra.mxu0 %v1669
    %2403 = vmatprep.subr.bf16.mxu0 %v1676
    %2404 = vmatpush1.bf16.msra.mxu0 %v1675
    %2405 = vmatprep.subr.bf16.mxu0 %v1682
    %2406 = vmatpush1.bf16.msra.mxu0 %v1681
    %2407 = vmatprep.subr.bf16.mxu0 %v1688
    %2408 = vmatpush1.bf16.msra.mxu0 %v1687
    %2409 = vmatprep.subr.bf16.mxu0 %v1694
    %2410 = vmatpush1.bf16.msra.mxu0 %v1693
    %2411 = vmatprep.subr.bf16.mxu0 %v1700
    %2412 = vmatpush1.bf16.msra.mxu0 %v1699
    %2413 = vmatprep.subr.bf16.mxu0 %v1706
    %2414 = vmatpush1.bf16.msra.mxu0 %v1705
    %2415 = vmatprep.mubr.bf16.mxu0 %v72
    %2416 = vmatmul.mubr.bf16.gmra.mrb[0].mxu0 %v71
    %v2417 = vpop.f32.mrb[0].mxu0
    %v2418 = vadd.f32 0.0, %v2417
    %v2419 = vpop.f32.mrb[0].mxu0
    %v2420 = vadd.f32 0.0, %v2419
    %v2421 = vpop.f32.mrb[0].mxu0
    %v2422 = vpop.f32.mrb[0].mxu0
    %2423 = vdwg.mxu0
    %2424 = vmatprep.subr.bf16.mxu0 %v1712
    %2425 = vmatpush1.bf16.msra.mxu0 %v1711
    %2426 = vmatprep.subr.bf16.mxu0 %v1718
    %2427 = vmatpush1.bf16.msra.mxu0 %v1717
    %2428 = vmatprep.subr.bf16.mxu0 %v1724
    %2429 = vmatpush1.bf16.msra.mxu0 %v1723
    %2430 = vmatprep.subr.bf16.mxu0 %v1730
    %2431 = vmatpush1.bf16.msra.mxu0 %v1729
    %2432 = vmatprep.subr.bf16.mxu0 %v1736
    %2433 = vmatpush1.bf16.msra.mxu0 %v1735
    %2434 = vmatprep.subr.bf16.mxu0 %v1742
    %2435 = vmatpush1.bf16.msra.mxu0 %v1741
    %2436 = vmatprep.subr.bf16.mxu0 %v1748
    %2437 = vmatpush1.bf16.msra.mxu0 %v1747
    %2438 = vmatprep.subr.bf16.mxu0 %v1754
    %2439 = vmatpush1.bf16.msra.mxu0 %v1753
    %2440 = vmatprep.subr.bf16.mxu0 %v1760
    %2441 = vmatpush1.bf16.msra.mxu0 %v1759
    %2442 = vmatprep.subr.bf16.mxu0 %v1766
    %2443 = vmatpush1.bf16.msra.mxu0 %v1765
    %2444 = vmatprep.subr.bf16.mxu0 %v1772
    %2445 = vmatpush1.bf16.msra.mxu0 %v1771
    %2446 = vmatprep.subr.bf16.mxu0 %v1778
    %2447 = vmatpush1.bf16.msra.mxu0 %v1777
    %2448 = vmatprep.subr.bf16.mxu0 %v1784
    %2449 = vmatpush1.bf16.msra.mxu0 %v1783
    %2450 = vmatprep.subr.bf16.mxu0 %v1790
    %2451 = vmatpush1.bf16.msra.mxu0 %v1789
    %2452 = vmatprep.subr.bf16.mxu0 %v1796
    %2453 = vmatpush1.bf16.msra.mxu0 %v1795
    %2454 = vmatprep.subr.bf16.mxu0 %v1802
    %2455 = vmatpush1.bf16.msra.mxu0 %v1801
    %2456 = vmatprep.mubr.bf16.mxu0 %v74
    %2457 = vmatmul.mubr.bf16.gmra.mrb[0].mxu0 %v73
    %v2458 = vpop.f32.mrb[0].mxu0
    %v2459 = vadd.f32 %v2418, %v2458
    %v2460 = vpop.f32.mrb[0].mxu0
    %v2461 = vadd.f32 %v2420, %v2460
    %v2462 = vpop.f32.mrb[0].mxu0
    %v2463 = vpop.f32.mrb[0].mxu0
    %2464 = vdwg.mxu0
    %2465 = vmatprep.subr.bf16.mxu0 %v1808
    %2466 = vmatpush1.bf16.msra.mxu0 %v1807
    %2467 = vmatprep.subr.bf16.mxu0 %v1814
    %2468 = vmatpush1.bf16.msra.mxu0 %v1813
    %2469 = vmatprep.subr.bf16.mxu0 %v1820
    %2470 = vmatpush1.bf16.msra.mxu0 %v1819
    %2471 = vmatprep.subr.bf16.mxu0 %v1826
    %2472 = vmatpush1.bf16.msra.mxu0 %v1825
    %2473 = vmatprep.subr.bf16.mxu0 %v1832
    %2474 = vmatpush1.bf16.msra.mxu0 %v1831
    %2475 = vmatprep.subr.bf16.mxu0 %v1838
    %2476 = vmatpush1.bf16.msra.mxu0 %v1837
    %2477 = vmatprep.subr.bf16.mxu0 %v1844
    %2478 = vmatpush1.bf16.msra.mxu0 %v1843
    %2479 = vmatprep.subr.bf16.mxu0 %v1850
    %2480 = vmatpush1.bf16.msra.mxu0 %v1849
    %2481 = vmatprep.subr.bf16.mxu0 %v1856
    %2482 = vmatpush1.bf16.msra.mxu0 %v1855
    %2483 = vmatprep.subr.bf16.mxu0 %v1862
    %2484 = vmatpush1.bf16.msra.mxu0 %v1861
    %2485 = vmatprep.subr.bf16.mxu0 %v1868
    %2486 = vmatpush1.bf16.msra.mxu0 %v1867
    %2487 = vmatprep.subr.bf16.mxu0 %v1874
    %2488 = vmatpush1.bf16.msra.mxu0 %v1873
    %2489 = vmatprep.subr.bf16.mxu0 %v1880
    %2490 = vmatpush1.bf16.msra.mxu0 %v1879
    %2491 = vmatprep.subr.bf16.mxu0 %v1886
    %2492 = vmatpush1.bf16.msra.mxu0 %v1885
    %2493 = vmatprep.subr.bf16.mxu0 %v1892
    %2494 = vmatpush1.bf16.msra.mxu0 %v1891
    %2495 = vmatprep.subr.bf16.mxu0 %v1898
    %2496 = vmatpush1.bf16.msra.mxu0 %v1897
    %2497 = vmatprep.mubr.bf16.mxu0 %v76
    %2498 = vmatmul.mubr.bf16.gmra.mrb[0].mxu0 %v75
    %v2499 = vpop.f32.mrb[0].mxu0
    %v2500 = vadd.f32 %v2459, %v2499
    %v2501 = vpop.f32.mrb[0].mxu0
    %v2502 = vadd.f32 %v2461, %v2501
    %v2503 = vpop.f32.mrb[0].mxu0
    %v2504 = vpop.f32.mrb[0].mxu0
    %2505 = vdwg.mxu0
    %2506 = vmatprep.subr.bf16.mxu0 %v1904
    %2507 = vmatpush1.bf16.msra.mxu0 %v1903
    %2508 = vmatprep.subr.bf16.mxu0 %v1910
    %2509 = vmatpush1.bf16.msra.mxu0 %v1909
    %2510 = vmatprep.subr.bf16.mxu0 %v1916
    %2511 = vmatpush1.bf16.msra.mxu0 %v1915
    %2512 = vmatprep.subr.bf16.mxu0 %v1922
    %2513 = vmatpush1.bf16.msra.mxu0 %v1921
    %2514 = vmatprep.subr.bf16.mxu0 %v1928
    %2515 = vmatpush1.bf16.msra.mxu0 %v1927
    %2516 = vmatprep.subr.bf16.mxu0 %v1934
    %2517 = vmatpush1.bf16.msra.mxu0 %v1933
    %2518 = vmatprep.subr.bf16.mxu0 %v1940
    %2519 = vmatpush1.bf16.msra.mxu0 %v1939
    %2520 = vmatprep.subr.bf16.mxu0 %v1946
    %2521 = vmatpush1.bf16.msra.mxu0 %v1945
    %2522 = vmatprep.subr.bf16.mxu0 %v1952
    %2523 = vmatpush1.bf16.msra.mxu0 %v1951
    %2524 = vmatprep.subr.bf16.mxu0 %v1958
    %2525 = vmatpush1.bf16.msra.mxu0 %v1957
    %2526 = vmatprep.subr.bf16.mxu0 %v1964
    %2527 = vmatpush1.bf16.msra.mxu0 %v1963
    %2528 = vmatprep.subr.bf16.mxu0 %v1970
    %2529 = vmatpush1.bf16.msra.mxu0 %v1969
    %2530 = vmatprep.subr.bf16.mxu0 %v1976
    %2531 = vmatpush1.bf16.msra.mxu0 %v1975
    %2532 = vmatprep.subr.bf16.mxu0 %v1982
    %2533 = vmatpush1.bf16.msra.mxu0 %v1981
    %2534 = vmatprep.subr.bf16.mxu0 %v1988
    %2535 = vmatpush1.bf16.msra.mxu0 %v1987
    %2536 = vmatprep.subr.bf16.mxu0 %v1994
    %2537 = vmatpush1.bf16.msra.mxu0 %v1993
    %2538 = vmatprep.mubr.bf16.mxu0 %v78
    %2539 = vmatmul.mubr.bf16.gmra.mrb[0].mxu0 %v77
    %v2540 = vpop.f32.mrb[0].mxu0
    %v2541 = vadd.f32 %v2500, %v2540
    %v2542 = vpop.f32.mrb[0].mxu0
    %v2543 = vadd.f32 %v2502, %v2542
    %v2544 = vpop.f32.mrb[0].mxu0
    %v2545 = vpop.f32.mrb[0].mxu0
    %2546 = vdwg.mxu0
    %2547 = vmatprep.subr.bf16.mxu0 %v1618
    %2548 = vmatpush1.bf16.msra.mxu0 %v1617
    %2549 = vmatprep.subr.bf16.mxu0 %v1624
    %2550 = vmatpush1.bf16.msra.mxu0 %v1623
    %2551 = vmatprep.subr.bf16.mxu0 %v1630
    %2552 = vmatpush1.bf16.msra.mxu0 %v1629
    %2553 = vmatprep.subr.bf16.mxu0 %v1636
    %2554 = vmatpush1.bf16.msra.mxu0 %v1635
    %2555 = vmatprep.subr.bf16.mxu0 %v1642
    %2556 = vmatpush1.bf16.msra.mxu0 %v1641
    %2557 = vmatprep.subr.bf16.mxu0 %v1648
    %2558 = vmatpush1.bf16.msra.mxu0 %v1647
    %2559 = vmatprep.subr.bf16.mxu0 %v1654
    %2560 = vmatpush1.bf16.msra.mxu0 %v1653
    %2561 = vmatprep.subr.bf16.mxu0 %v1660
    %2562 = vmatpush1.bf16.msra.mxu0 %v1659
    %2563 = vmatprep.subr.bf16.mxu0 %v1666
    %2564 = vmatpush1.bf16.msra.mxu0 %v1665
    %2565 = vmatprep.subr.bf16.mxu0 %v1672
    %2566 = vmatpush1.bf16.msra.mxu0 %v1671
    %2567 = vmatprep.subr.bf16.mxu0 %v1678
    %2568 = vmatpush1.bf16.msra.mxu0 %v1677
    %2569 = vmatprep.subr.bf16.mxu0 %v1684
    %2570 = vmatpush1.bf16.msra.mxu0 %v1683
    %2571 = vmatprep.subr.bf16.mxu0 %v1690
    %2572 = vmatpush1.bf16.msra.mxu0 %v1689
    %2573 = vmatprep.subr.bf16.mxu0 %v1696
    %2574 = vmatpush1.bf16.msra.mxu0 %v1695
    %2575 = vmatprep.subr.bf16.mxu0 %v1702
    %2576 = vmatpush1.bf16.msra.mxu0 %v1701
    %2577 = vmatprep.subr.bf16.mxu0 %v1708
    %2578 = vmatpush1.bf16.msra.mxu0 %v1707
    %2579 = vmatprep.mubr.bf16.mxu0 %v72
    %2580 = vmatmul.mubr.bf16.gmra.mrb[0].mxu0 %v71
    %v2581 = vpop.f32.mrb[0].mxu0
    %v2582 = vadd.f32 0.0, %v2581
    %v2583 = vpop.f32.mrb[0].mxu0
    %v2584 = vadd.f32 0.0, %v2583
    %v2585 = vpop.f32.mrb[0].mxu0
    %v2586 = vpop.f32.mrb[0].mxu0
    %2587 = vdwg.mxu0
    %2588 = vmatprep.subr.bf16.mxu0 %v1714
    %2589 = vmatpush1.bf16.msra.mxu0 %v1713
    %2590 = vmatprep.subr.bf16.mxu0 %v1720
    %2591 = vmatpush1.bf16.msra.mxu0 %v1719
    %2592 = vmatprep.subr.bf16.mxu0 %v1726
    %2593 = vmatpush1.bf16.msra.mxu0 %v1725
    %2594 = vmatprep.subr.bf16.mxu0 %v1732
    %2595 = vmatpush1.bf16.msra.mxu0 %v1731
    %2596 = vmatprep.subr.bf16.mxu0 %v1738
    %2597 = vmatpush1.bf16.msra.mxu0 %v1737
    %2598 = vmatprep.subr.bf16.mxu0 %v1744
    %2599 = vmatpush1.bf16.msra.mxu0 %v1743
    %2600 = vmatprep.subr.bf16.mxu0 %v1750
    %2601 = vmatpush1.bf16.msra.mxu0 %v1749
    %2602 = vmatprep.subr.bf16.mxu0 %v1756
    %2603 = vmatpush1.bf16.msra.mxu0 %v1755
    %2604 = vmatprep.subr.bf16.mxu0 %v1762
    %2605 = vmatpush1.bf16.msra.mxu0 %v1761
    %2606 = vmatprep.subr.bf16.mxu0 %v1768
    %2607 = vmatpush1.bf16.msra.mxu0 %v1767
    %2608 = vmatprep.subr.bf16.mxu0 %v1774
    %2609 = vmatpush1.bf16.msra.mxu0 %v1773
    %2610 = vmatprep.subr.bf16.mxu0 %v1780
    %2611 = vmatpush1.bf16.msra.mxu0 %v1779
    %2612 = vmatprep.subr.bf16.mxu0 %v1786
    %2613 = vmatpush1.bf16.msra.mxu0 %v1785
    %2614 = vmatprep.subr.bf16.mxu0 %v1792
    %2615 = vmatpush1.bf16.msra.mxu0 %v1791
    %2616 = vmatprep.subr.bf16.mxu0 %v1798
    %2617 = vmatpush1.bf16.msra.mxu0 %v1797
    %2618 = vmatprep.subr.bf16.mxu0 %v1804
    %2619 = vmatpush1.bf16.msra.mxu0 %v1803
    %2620 = vmatprep.mubr.bf16.mxu0 %v74
    %2621 = vmatmul.mubr.bf16.gmra.mrb[0].mxu0 %v73
    %v2622 = vpop.f32.mrb[0].mxu0
    %v2623 = vadd.f32 %v2582, %v2622
    %v2624 = vpop.f32.mrb[0].mxu0
    %v2625 = vadd.f32 %v2584, %v2624
    %v2626 = vpop.f32.mrb[0].mxu0
    %v2627 = vpop.f32.mrb[0].mxu0
    %2628 = vdwg.mxu0
    %2629 = vmatprep.subr.bf16.mxu0 %v1810
    %2630 = vmatpush1.bf16.msra.mxu0 %v1809
    %2631 = vmatprep.subr.bf16.mxu0 %v1816
    %2632 = vmatpush1.bf16.msra.mxu0 %v1815
    %2633 = vmatprep.subr.bf16.mxu0 %v1822
    %2634 = vmatpush1.bf16.msra.mxu0 %v1821
    %2635 = vmatprep.subr.bf16.mxu0 %v1828
    %2636 = vmatpush1.bf16.msra.mxu0 %v1827
    %2637 = vmatprep.subr.bf16.mxu0 %v1834
    %2638 = vmatpush1.bf16.msra.mxu0 %v1833
    %2639 = vmatprep.subr.bf16.mxu0 %v1840
    %2640 = vmatpush1.bf16.msra.mxu0 %v1839
    %2641 = vmatprep.subr.bf16.mxu0 %v1846
    %2642 = vmatpush1.bf16.msra.mxu0 %v1845
    %2643 = vmatprep.subr.bf16.mxu0 %v1852
    %2644 = vmatpush1.bf16.msra.mxu0 %v1851
    %2645 = vmatprep.subr.bf16.mxu0 %v1858
    %2646 = vmatpush1.bf16.msra.mxu0 %v1857
    %2647 = vmatprep.subr.bf16.mxu0 %v1864
    %2648 = vmatpush1.bf16.msra.mxu0 %v1863
    %2649 = vmatprep.subr.bf16.mxu0 %v1870
    %2650 = vmatpush1.bf16.msra.mxu0 %v1869
    %2651 = vmatprep.subr.bf16.mxu0 %v1876
    %2652 = vmatpush1.bf16.msra.mxu0 %v1875
    %2653 = vmatprep.subr.bf16.mxu0 %v1882
    %2654 = vmatpush1.bf16.msra.mxu0 %v1881
    %2655 = vmatprep.subr.bf16.mxu0 %v1888
    %2656 = vmatpush1.bf16.msra.mxu0 %v1887
    %2657 = vmatprep.subr.bf16.mxu0 %v1894
    %2658 = vmatpush1.bf16.msra.mxu0 %v1893
    %2659 = vmatprep.subr.bf16.mxu0 %v1900
    %2660 = vmatpush1.bf16.msra.mxu0 %v1899
    %2661 = vmatprep.mubr.bf16.mxu0 %v76
    %2662 = vmatmul.mubr.bf16.gmra.mrb[0].mxu0 %v75
    %v2663 = vpop.f32.mrb[0].mxu0
    %v2664 = vadd.f32 %v2623, %v2663
    %v2665 = vpop.f32.mrb[0].mxu0
    %v2666 = vadd.f32 %v2625, %v2665
    %v2667 = vpop.f32.mrb[0].mxu0
    %v2668 = vpop.f32.mrb[0].mxu0
    %2669 = vdwg.mxu0
    %2670 = vmatprep.subr.bf16.mxu0 %v1906
    %2671 = vmatpush1.bf16.msra.mxu0 %v1905
    %2672 = vmatprep.subr.bf16.mxu0 %v1912
    %2673 = vmatpush1.bf16.msra.mxu0 %v1911
    %2674 = vmatprep.subr.bf16.mxu0 %v1918
    %2675 = vmatpush1.bf16.msra.mxu0 %v1917
    %2676 = vmatprep.subr.bf16.mxu0 %v1924
    %2677 = vmatpush1.bf16.msra.mxu0 %v1923
    %2678 = vmatprep.subr.bf16.mxu0 %v1930
    %2679 = vmatpush1.bf16.msra.mxu0 %v1929
    %2680 = vmatprep.subr.bf16.mxu0 %v1936
    %2681 = vmatpush1.bf16.msra.mxu0 %v1935
    %2682 = vmatprep.subr.bf16.mxu0 %v1942
    %2683 = vmatpush1.bf16.msra.mxu0 %v1941
    %2684 = vmatprep.subr.bf16.mxu0 %v1948
    %2685 = vmatpush1.bf16.msra.mxu0 %v1947
    %2686 = vmatprep.subr.bf16.mxu0 %v1954
    %2687 = vmatpush1.bf16.msra.mxu0 %v1953
    %2688 = vmatprep.subr.bf16.mxu0 %v1960
    %2689 = vmatpush1.bf16.msra.mxu0 %v1959
    %2690 = vmatprep.subr.bf16.mxu0 %v1966
    %2691 = vmatpush1.bf16.msra.mxu0 %v1965
    %2692 = vmatprep.subr.bf16.mxu0 %v1972
    %2693 = vmatpush1.bf16.msra.mxu0 %v1971
    %2694 = vmatprep.subr.bf16.mxu0 %v1978
    %2695 = vmatpush1.bf16.msra.mxu0 %v1977
    %2696 = vmatprep.subr.bf16.mxu0 %v1984
    %2697 = vmatpush1.bf16.msra.mxu0 %v1983
    %2698 = vmatprep.subr.bf16.mxu0 %v1990
    %2699 = vmatpush1.bf16.msra.mxu0 %v1989
    %2700 = vmatprep.subr.bf16.mxu0 %v1996
    %2701 = vmatpush1.bf16.msra.mxu0 %v1995
    %2702 = vmatprep.mubr.bf16.mxu0 %v78
    %2703 = vmatmul.mubr.bf16.gmra.mrb[0].mxu0 %v77
    %v2704 = vpop.f32.mrb[0].mxu0
    %v2705 = vadd.f32 %v2664, %v2704
    %v2706 = vpop.f32.mrb[0].mxu0
    %v2707 = vadd.f32 %v2666, %v2706
    %v2708 = vpop.f32.mrb[0].mxu0
    %v2709 = vpop.f32.mrb[0].mxu0
    %2710 = vdwg.mxu0
    %2711 = vmatprep.subr.bf16.mxu0 %v1620
    %2712 = vmatpush1.bf16.msra.mxu0 %v1619
    %2713 = vmatprep.subr.bf16.mxu0 %v1626
    %2714 = vmatpush1.bf16.msra.mxu0 %v1625
    %2715 = vmatprep.subr.bf16.mxu0 %v1632
    %2716 = vmatpush1.bf16.msra.mxu0 %v1631
    %2717 = vmatprep.subr.bf16.mxu0 %v1638
    %2718 = vmatpush1.bf16.msra.mxu0 %v1637
    %2719 = vmatprep.subr.bf16.mxu0 %v1644
    %2720 = vmatpush1.bf16.msra.mxu0 %v1643
    %2721 = vmatprep.subr.bf16.mxu0 %v1650
    %2722 = vmatpush1.bf16.msra.mxu0 %v1649
    %2723 = vmatprep.subr.bf16.mxu0 %v1656
    %2724 = vmatpush1.bf16.msra.mxu0 %v1655
    %2725 = vmatprep.subr.bf16.mxu0 %v1662
    %2726 = vmatpush1.bf16.msra.mxu0 %v1661
    %2727 = vmatprep.subr.bf16.mxu0 %v1668
    %2728 = vmatpush1.bf16.msra.mxu0 %v1667
    %2729 = vmatprep.subr.bf16.mxu0 %v1674
    %2730 = vmatpush1.bf16.msra.mxu0 %v1673
    %2731 = vmatprep.subr.bf16.mxu0 %v1680
    %2732 = vmatpush1.bf16.msra.mxu0 %v1679
    %2733 = vmatprep.subr.bf16.mxu0 %v1686
    %2734 = vmatpush1.bf16.msra.mxu0 %v1685
    %2735 = vmatprep.subr.bf16.mxu0 %v1692
    %2736 = vmatpush1.bf16.msra.mxu0 %v1691
    %2737 = vmatprep.subr.bf16.mxu0 %v1698
    %2738 = vmatpush1.bf16.msra.mxu0 %v1697
    %2739 = vmatprep.subr.bf16.mxu0 %v1704
    %2740 = vmatpush1.bf16.msra.mxu0 %v1703
    %2741 = vmatprep.subr.bf16.mxu0 %v1710
    %2742 = vmatpush1.bf16.msra.mxu0 %v1709
    %2743 = vmatprep.mubr.bf16.mxu0 %v72
    %2744 = vmatmul.mubr.bf16.gmra.mrb[0].mxu0 %v71
    %v2745 = vpop.f32.mrb[0].mxu0
    %v2746 = vadd.f32 0.0, %v2745
    %v2747 = vpop.f32.mrb[0].mxu0
    %v2748 = vadd.f32 0.0, %v2747
    %v2749 = vpop.f32.mrb[0].mxu0
    %v2750 = vpop.f32.mrb[0].mxu0
    %2751 = vdwg.mxu0
    %2752 = vmatprep.subr.bf16.mxu0 %v1716
    %2753 = vmatpush1.bf16.msra.mxu0 %v1715
    %2754 = vmatprep.subr.bf16.mxu0 %v1722
    %2755 = vmatpush1.bf16.msra.mxu0 %v1721
    %2756 = vmatprep.subr.bf16.mxu0 %v1728
    %2757 = vmatpush1.bf16.msra.mxu0 %v1727
    %2758 = vmatprep.subr.bf16.mxu0 %v1734
    %2759 = vmatpush1.bf16.msra.mxu0 %v1733
    %2760 = vmatprep.subr.bf16.mxu0 %v1740
    %2761 = vmatpush1.bf16.msra.mxu0 %v1739
    %2762 = vmatprep.subr.bf16.mxu0 %v1746
    %2763 = vmatpush1.bf16.msra.mxu0 %v1745
    %2764 = vmatprep.subr.bf16.mxu0 %v1752
    %2765 = vmatpush1.bf16.msra.mxu0 %v1751
    %2766 = vmatprep.subr.bf16.mxu0 %v1758
    %2767 = vmatpush1.bf16.msra.mxu0 %v1757
    %2768 = vmatprep.subr.bf16.mxu0 %v1764
    %2769 = vmatpush1.bf16.msra.mxu0 %v1763
    %2770 = vmatprep.subr.bf16.mxu0 %v1770
    %2771 = vmatpush1.bf16.msra.mxu0 %v1769
    %2772 = vmatprep.subr.bf16.mxu0 %v1776
    %2773 = vmatpush1.bf16.msra.mxu0 %v1775
    %2774 = vmatprep.subr.bf16.mxu0 %v1782
    %2775 = vmatpush1.bf16.msra.mxu0 %v1781
    %2776 = vmatprep.subr.bf16.mxu0 %v1788
    %2777 = vmatpush1.bf16.msra.mxu0 %v1787
    %2778 = vmatprep.subr.bf16.mxu0 %v1794
    %2779 = vmatpush1.bf16.msra.mxu0 %v1793
    %2780 = vmatprep.subr.bf16.mxu0 %v1800
    %2781 = vmatpush1.bf16.msra.mxu0 %v1799
    %2782 = vmatprep.subr.bf16.mxu0 %v1806
    %2783 = vmatpush1.bf16.msra.mxu0 %v1805
    %2784 = vmatprep.mubr.bf16.mxu0 %v74
    %2785 = vmatmul.mubr.bf16.gmra.mrb[0].mxu0 %v73
    %v2786 = vpop.f32.mrb[0].mxu0
    %v2787 = vadd.f32 %v2746, %v2786
    %v2788 = vpop.f32.mrb[0].mxu0
    %v2789 = vadd.f32 %v2748, %v2788
    %v2790 = vpop.f32.mrb[0].mxu0
    %v2791 = vpop.f32.mrb[0].mxu0
    %2792 = vdwg.mxu0
    %2793 = vmatprep.subr.bf16.mxu0 %v1812
    %2794 = vmatpush1.bf16.msra.mxu0 %v1811
    %2795 = vmatprep.subr.bf16.mxu0 %v1818
    %2796 = vmatpush1.bf16.msra.mxu0 %v1817
    %2797 = vmatprep.subr.bf16.mxu0 %v1824
    %2798 = vmatpush1.bf16.msra.mxu0 %v1823
    %2799 = vmatprep.subr.bf16.mxu0 %v1830
    %2800 = vmatpush1.bf16.msra.mxu0 %v1829
    %2801 = vmatprep.subr.bf16.mxu0 %v1836
    %2802 = vmatpush1.bf16.msra.mxu0 %v1835
    %2803 = vmatprep.subr.bf16.mxu0 %v1842
    %2804 = vmatpush1.bf16.msra.mxu0 %v1841
    %2805 = vmatprep.subr.bf16.mxu0 %v1848
    %2806 = vmatpush1.bf16.msra.mxu0 %v1847
    %2807 = vmatprep.subr.bf16.mxu0 %v1854
    %2808 = vmatpush1.bf16.msra.mxu0 %v1853
    %2809 = vmatprep.subr.bf16.mxu0 %v1860
    %2810 = vmatpush1.bf16.msra.mxu0 %v1859
    %2811 = vmatprep.subr.bf16.mxu0 %v1866
    %2812 = vmatpush1.bf16.msra.mxu0 %v1865
    %2813 = vmatprep.subr.bf16.mxu0 %v1872
    %2814 = vmatpush1.bf16.msra.mxu0 %v1871
    %2815 = vmatprep.subr.bf16.mxu0 %v1878
    %2816 = vmatpush1.bf16.msra.mxu0 %v1877
    %2817 = vmatprep.subr.bf16.mxu0 %v1884
    %2818 = vmatpush1.bf16.msra.mxu0 %v1883
    %2819 = vmatprep.subr.bf16.mxu0 %v1890
    %2820 = vmatpush1.bf16.msra.mxu0 %v1889
    %2821 = vmatprep.subr.bf16.mxu0 %v1896
    %2822 = vmatpush1.bf16.msra.mxu0 %v1895
    %2823 = vmatprep.subr.bf16.mxu0 %v1902
    %2824 = vmatpush1.bf16.msra.mxu0 %v1901
    %2825 = vmatprep.mubr.bf16.mxu0 %v76
    %2826 = vmatmul.mubr.bf16.gmra.mrb[0].mxu0 %v75
    %v2827 = vpop.f32.mrb[0].mxu0
    %v2828 = vadd.f32 %v2787, %v2827
    %v2829 = vpop.f32.mrb[0].mxu0
    %v2830 = vadd.f32 %v2789, %v2829
    %v2831 = vpop.f32.mrb[0].mxu0
    %v2832 = vpop.f32.mrb[0].mxu0
    %2833 = vdwg.mxu0
    %2834 = vmatprep.subr.bf16.mxu0 %v1908
    %2835 = vmatpush1.bf16.msra.mxu0 %v1907
    %2836 = vmatprep.subr.bf16.mxu0 %v1914
    %2837 = vmatpush1.bf16.msra.mxu0 %v1913
    %2838 = vmatprep.subr.bf16.mxu0 %v1920
    %2839 = vmatpush1.bf16.msra.mxu0 %v1919
    %2840 = vmatprep.subr.bf16.mxu0 %v1926
    %2841 = vmatpush1.bf16.msra.mxu0 %v1925
    %2842 = vmatprep.subr.bf16.mxu0 %v1932
    %2843 = vmatpush1.bf16.msra.mxu0 %v1931
    %2844 = vmatprep.subr.bf16.mxu0 %v1938
    %2845 = vmatpush1.bf16.msra.mxu0 %v1937
    %2846 = vmatprep.subr.bf16.mxu0 %v1944
    %2847 = vmatpush1.bf16.msra.mxu0 %v1943
    %2848 = vmatprep.subr.bf16.mxu0 %v1950
    %2849 = vmatpush1.bf16.msra.mxu0 %v1949
    %2850 = vmatprep.subr.bf16.mxu0 %v1956
    %2851 = vmatpush1.bf16.msra.mxu0 %v1955
    %2852 = vmatprep.subr.bf16.mxu0 %v1962
    %2853 = vmatpush1.bf16.msra.mxu0 %v1961
    %2854 = vmatprep.subr.bf16.mxu0 %v1968
    %2855 = vmatpush1.bf16.msra.mxu0 %v1967
    %2856 = vmatprep.subr.bf16.mxu0 %v1974
    %2857 = vmatpush1.bf16.msra.mxu0 %v1973
    %2858 = vmatprep.subr.bf16.mxu0 %v1980
    %2859 = vmatpush1.bf16.msra.mxu0 %v1979
    %2860 = vmatprep.subr.bf16.mxu0 %v1986
    %2861 = vmatpush1.bf16.msra.mxu0 %v1985
    %2862 = vmatprep.subr.bf16.mxu0 %v1992
    %2863 = vmatpush1.bf16.msra.mxu0 %v1991
    %2864 = vmatprep.subr.bf16.mxu0 %v1998
    %2865 = vmatpush1.bf16.msra.mxu0 %v1997
    %2866 = vmatprep.mubr.bf16.mxu0 %v78
    %2867 = vmatmul.mubr.bf16.gmra.mrb[0].mxu0 %v77
    %v2868 = vpop.f32.mrb[0].mxu0
    %v2869 = vadd.f32 %v2828, %v2868
    %v2870 = vpop.f32.mrb[0].mxu0
    %v2871 = vadd.f32 %v2830, %v2870
    %v2872 = vpop.f32.mrb[0].mxu0
    %v2873 = vpop.f32.mrb[0].mxu0
    %2874 = vdwg.mxu0
    %vm2875 = vcmp.gt.f32.partialorder %v2869, 0.0
    %v2876 = vsel %vm2875, 1, 0
    %vm2877 = vcmask 1041408
    %v2878 = vsel %vm2877, %v2876, 0
    %v2879 = vand.u32 %v2878, 65535
    %v2880 = vshrl.u32 %v2878, 16
    %v2881 = vcvt.s32.f32 %v2879
    %v2882 = vcvt.s32.f32 %v2880
    %2883 = vadd.xlane.f32.xlu0 %v2881
    %v2884 = vpop.xlane.xlu0 %2883
    %2885 = vadd.xlane.f32.xlu0 %v2882
    %v2886 = vpop.xlane.xlu0 %2885
    %v2887 = vcvt.f32.s32 %v2884
    %v2888 = vcvt.f32.s32 %v2886
    %v2889 = vshll.u32 %v2888, 16
    %v2890 = vadd.s32 %v2889, %v2887
    %v2891 = vlaneseq
    %v2892 = vand.u32 %v2891, 127
    %vm2893 = vcmp.ge.s32.totalorder %v2892, %v2890
    %v2894 = vand.u32 2147483647, %v2871
    %v2895 = vmul.f32 %v2894, 3.0
    %v2896 = vfloor.f32 %v2895
    %v2897 = vrcp.pop 10.0
    %v2898 = vmul.f32 %v2896, %v2897
    %v2899 = vfloor.f32 %v2898
    %v2900 = vmul.f32 %v2899, 10.0
    %v2901 = vsub.f32 %v2896, %v2900
    %v2902 = vsel %vm2893, -1.0, %v2901
    %v2907 = vcombine.low %v2541, %v2543
    %v2908 = vcombine.low %v2705, %v2707
    %v2910 = vunpack.c.l.s4 1983009808
    %v2911 = vunpack.c.0.s8 %v2910
    %v2912 = vlaneseq
    %v2913 = vshrl.u32 %v2912, 7
    %v2914 = vsub.s32 %v2911, %v2913
    %v2915 = vrot.slane %v2907, %v2914
    %v2917 = vunpack.c.l.s4 1983009808
    %v2918 = vunpack.c.0.s8 %v2917
    %v2919 = vlaneseq
    %v2920 = vshrl.u32 %v2919, 7
    %v2921 = vsub.s32 %v2918, %v2920
    %v2922 = vrot.slane %v2908, %v2921
    %v2923 = vcombine.low %v2915, %v2922
    %2925 = vst [vmem:[%s2] sm:$0xff] %v2923
    %v2926 = vsub.f32 0.0, %v2869
    %v2927 = vmul.f32 %v2926, 1.442695
    %v2928 = vpow.pop %v2927
    %v2929 = vadd.f32 %v2928, 1.0
    %v2930 = vrcp.pop %v2929
    %v2931 = vmul.f32 1.0, %v2930
    %2932 = vst [vmem:[%s2 + $0x8] sm:$0x3] %v2931
    %v2933 = vcvt.s32.f32 %v2890
    %2934 = vst [vmem:[%s2 + $0xa] sm:$0x3] %v2933
    %2935 = vst [vmem:[%s2 + $0xc] sm:$0x3] %v2902
    // Predicated region
    $region14: #{end2end_rv_fill_output.1} parent=1 // pred_check
      _
    $region15: #{end2end_rv_fill_output.1} parent=1 // pred_check_branch
      %2937 = sbr.rel (0) target = $region17
    $region16: #{end2end_rv_fill_output.1} parent=1 // pred_region
      _
    $region17: #{end2end_rv_fill_output.1} parent=1 // pred_fallthru
      _
    // Predicated region
    $region18: #{end2end_rv_fill_output.1} parent=1 // pred_check
      _
    $region19: #{end2end_rv_fill_output.1} parent=1 // pred_check_branch
      %2939 = sbr.rel (0) target = $region21
    $region20: #{end2end_rv_fill_output.1} parent=1 // pred_region
      _
    $region21: #{end2end_rv_fill_output.1} parent=1 // pred_fallthru
      _
    %2940 = vsyncpa [#allocation3], 1

</llo_original>
